<compile_context>
chip_gen: v7x
topology: tpu7x:2x2x1
jax: 0.10.0
libtpu: 0.0.40
codegen_flags: <defaults>
</compile_context>

<pallas_src>
import math
from functools import partial

import jax
import jax.numpy as jnp
from jax import lax
from jax.experimental import pallas as pl
from jax.experimental.pallas import tpu as pltpu

_MASK_VALUE = -1e30                      # finite "minus infinity" for masking
_VMEM_LIMIT = 48 * 1024 * 1024           # > 32 MiB scoped default, < 64 MiB v7x physical


# ----------------------------------------------------------------------------
# Tile-size helpers (respect the (8, 128) block-shape constraint: a block dim
# must be a multiple of 8 (sublane) / 128 (lane) or equal to the full dim).
# ----------------------------------------------------------------------------
def _tile_sublane(dim, desired):
    if dim <= desired:
        return dim
    t = desired
    while t >= 8:
        if dim % t == 0:
            return t
        t //= 2
    return dim


def _tile_lane(dim, desired):
    if dim <= desired:
        return dim
    t = desired
    while t >= 128:
        if dim % t == 0:
            return t
        t //= 2
    return dim


# ----------------------------------------------------------------------------
# Tiled linear kernel:  out = x @ W^T + b
# x: (M, K), W: (N, K), b: (N,) -> out: (M, N)
# grid = (M//tm, N//tn, K//tk), f32 VMEM accumulator across the K axis.
# ----------------------------------------------------------------------------
def _linear_kernel(x_ref, w_ref, b_ref, o_ref, acc_ref):
    kk = pl.program_id(2)

    @pl.when(kk == 0)
    def _init():
        acc_ref[...] = jnp.zeros_like(acc_ref)

    # Contract x's K with w's K directly -- no in-kernel transpose of W.
    acc_ref[...] += lax.dot_general(
        x_ref[...], w_ref[...],
        dimension_numbers=(((1,), (1,)), ((), ())),
        preferred_element_type=jnp.float32)

    @pl.when(kk == pl.num_programs(2) - 1)
    def _finalize():
        o_ref[...] = (acc_ref[...] + b_ref[...].astype(jnp.float32)).astype(o_ref.dtype)


def pallas_linear(x, w, b, *, tm=256, tn=256, tk=512):
    M, K = x.shape
    N, K2 = w.shape
    assert K == K2
    tm = _tile_sublane(M, tm)
    tn = _tile_lane(N, tn)
    tk = _tile_lane(K, tk)
    grid = (M // tm, N // tn, K // tk)
    return pl.pallas_call(
        _linear_kernel,
        out_shape=jax.ShapeDtypeStruct((M, N), x.dtype),
        grid_spec=pltpu.PrefetchScalarGridSpec(
            num_scalar_prefetch=0,
            grid=grid,
            in_specs=[
                pl.BlockSpec((tm, tk), lambda i, j, k: (i, k)),
                pl.BlockSpec((tn, tk), lambda i, j, k: (j, k)),
                pl.BlockSpec((1, tn), lambda i, j, k: (0, j)),
            ],
            out_specs=pl.BlockSpec((tm, tn), lambda i, j, k: (i, j)),
            scratch_shapes=[pltpu.VMEM((tm, tn), jnp.float32)],
        ),
        compiler_params=pltpu.CompilerParams(
            dimension_semantics=("parallel", "parallel", "arbitrary"),
            vmem_limit_bytes=_VMEM_LIMIT),
    )(x, w, b.reshape(1, N))


# ----------------------------------------------------------------------------
# Flash-style causal attention over the fused qkv activation.
# qkv: (B, T, 3C) with layout [q(C) | k(C) | v(C)] and head h at cols h*hd:(h+1)*hd.
# One kernel instance handles all heads of one (batch, q-tile); kv tiles stream
# along the last ("arbitrary") grid axis with online softmax in VMEM scratch.
# ----------------------------------------------------------------------------
def _flash_attn_kernel(qkv_q_ref, qkv_kv_ref, o_ref, m_ref, l_ref, acc_ref,
                       *, n_head, head_dim, scale, tq, tk):
    qi = pl.program_id(1)
    ki = pl.program_id(2)
    C = n_head * head_dim

    @pl.when(ki == 0)
    def _init():
        m_ref[...] = jnp.full_like(m_ref, _MASK_VALUE)
        l_ref[...] = jnp.zeros_like(l_ref)
        acc_ref[...] = jnp.zeros_like(acc_ref)

    # Structural causal skip: kv tiles strictly above the diagonal do no work.
    @pl.when(ki * tk < (qi + 1) * tq)
    def _compute():
        qkv_q = qkv_q_ref[0]      # (tq, 3C), input dtype (no f32 upcast)
        qkv_kv = qkv_kv_ref[0]    # (tk, 3C), input dtype

        # Per-tile causal mask, built once and shared by every head.
        row = qi * tq + lax.broadcasted_iota(jnp.int32, (tq, tk), 0)
        col = ki * tk + lax.broadcasted_iota(jnp.int32, (tq, tk), 1)
        causal = col <= row

        for h in range(n_head):
            lo = h * head_dim
            hi = lo + head_dim
            # Fold 1/sqrt(hd) into q: O(tq*hd) instead of O(tq*tk).
            q = qkv_q[:, lo:hi] * scale                     # (tq, hd)
            k = qkv_kv[:, C + lo:C + hi]                    # (tk, hd)
            v = qkv_kv[:, 2 * C + lo:2 * C + hi]            # (tk, hd)

            s = lax.dot_general(                            # (tq, tk), f32 acc
                q, k, dimension_numbers=(((1,), (1,)), ((), ())),
                preferred_element_type=jnp.float32)
            s = jnp.where(causal, s, _MASK_VALUE)

            m_prev = m_ref[h]                               # (tq, 1)
            m_new = jnp.maximum(m_prev, jnp.max(s, axis=-1, keepdims=True))
            alpha = jnp.exp(m_prev - m_new)
            p = jnp.exp(s - m_new)                          # unnormalized probs
            l_ref[h] = alpha * l_ref[h] + jnp.sum(p, axis=-1, keepdims=True)
            acc_ref[h] = alpha * acc_ref[h] + jnp.dot(
                p.astype(v.dtype), v, preferred_element_type=jnp.float32)
            m_ref[h] = m_new

    @pl.when(ki == pl.num_programs(2) - 1)
    def _finalize():
        # Deferred softmax normalization; approx reciprocal uses the EUP slot.
        outs = []
        for h in range(n_head):
            inv_l = pl.reciprocal(l_ref[h], approx=True)    # (tq, 1)
            outs.append(acc_ref[h] * inv_l)
        # Single lane-dense (tq, C) store, already in (B, T, C) layout.
        o_ref[0] = jnp.concatenate(outs, axis=-1).astype(o_ref.dtype)


def pallas_flash_attention(qkv, n_head, *, tq=256, tk=256):
    B, T, C3 = qkv.shape
    C = C3 // 3
    head_dim = C // n_head
    scale = 1.0 / math.sqrt(head_dim)
    tq = _tile_sublane(T, tq)
    tk = _tile_sublane(T, tk)
    grid = (B, T // tq, T // tk)

    kernel = partial(_flash_attn_kernel, n_head=n_head, head_dim=head_dim,
                     scale=scale, tq=tq, tk=tk)

    # qkv is passed twice: once windowed over q tiles, once over kv tiles, so
    # q/k/v are read straight from the fused activation (no split / transposes).
    return pl.pallas_call(
        kernel,
        out_shape=jax.ShapeDtypeStruct((B, T, C), qkv.dtype),
        grid_spec=pltpu.PrefetchScalarGridSpec(
            num_scalar_prefetch=0,
            grid=grid,
            in_specs=[
                pl.BlockSpec((1, tq, 3 * C), lambda b, qi, ki: (b, qi, 0)),
                pl.BlockSpec((1, tk, 3 * C), lambda b, qi, ki: (b, ki, 0)),
            ],
            out_specs=pl.BlockSpec((1, tq, C), lambda b, qi, ki: (b, qi, 0)),
            scratch_shapes=[
                pltpu.VMEM((n_head, tq, 1), jnp.float32),          # running max m
                pltpu.VMEM((n_head, tq, 1), jnp.float32),          # running denom l
                pltpu.VMEM((n_head, tq, head_dim), jnp.float32),   # unnormalized acc
            ],
        ),
        compiler_params=pltpu.CompilerParams(
            dimension_semantics=("parallel", "parallel", "arbitrary"),
            vmem_limit_bytes=_VMEM_LIMIT),
    )(qkv, qkv)


# ----------------------------------------------------------------------------
# Full module forward (no transposes anywhere; reshapes below are contiguous).
# ----------------------------------------------------------------------------
def causal_self_attention(x, params, n_head):
    B, T, C = x.shape
    qkv = pallas_linear(x.reshape(B * T, C), params["w_attn"], params["b_attn"])
    qkv = qkv.reshape(B, T, 3 * C)                       # free reshape
    y = pallas_flash_attention(qkv, n_head)              # (B, T, C) directly
    out = pallas_linear(y.reshape(B * T, C), params["w_proj"], params["b_proj"])
    return out.reshape(B, T, C)


# ----------------------------------------------------------------------------
# Pure-JAX reference for correctness check
# ----------------------------------------------------------------------------
def reference(x, params, n_head):
    B, T, C = x.shape
    hd = C // n_head
    qkv = x @ params["w_attn"].T + params["b_attn"]
    q, k, v = jnp.split(qkv, 3, axis=2)
    q = q.reshape(B, T, n_head, hd).transpose(0, 2, 1, 3)
    k = k.reshape(B, T, n_head, hd).transpose(0, 2, 1, 3)
    v = v.reshape(B, T, n_head, hd).transpose(0, 2, 1, 3)
    att = (q @ jnp.swapaxes(k, -2, -1)) / math.sqrt(hd)
    mask = jnp.tril(jnp.ones((T, T), dtype=bool))
    att = jnp.where(mask[None, None], att, -jnp.inf)
    att = jax.nn.softmax(att, axis=-1)
    y = att @ v
    y = y.transpose(0, 2, 1, 3).reshape(B, T, C)
    return y @ params["w_proj"].T + params["b_proj"]


if __name__ == "__main__":
    # config: n_embd=32, n_head=4, block_size>=T, bias=True, dropout=0.0 (eval)
    B, T, C, n_head = 2, 8, 32, 4

    key = jax.random.PRNGKey(0)
    k_x, k_wa, k_ba, k_wp, k_bp = jax.random.split(key, 5)

    x = jax.random.normal(k_x, (B, T, C), dtype=jnp.float32)
    params = {
        "w_attn": jax.random.normal(k_wa, (3 * C, C), dtype=jnp.float32) * 0.02,
        "b_attn": jax.random.normal(k_ba, (3 * C,), dtype=jnp.float32) * 0.02,
        "w_proj": jax.random.normal(k_wp, (C, C), dtype=jnp.float32) * 0.02,
        "b_proj": jax.random.normal(k_bp, (C,), dtype=jnp.float32) * 0.02,
    }

    out = jax.jit(partial(causal_self_attention, n_head=n_head))(x, params)
    out = jax.block_until_ready(out)

    ref = reference(x, params, n_head)
    assert out.shape == (B, T, C)
    # Tolerance accounts for the approximate (EUP) reciprocal in the softmax
    # normalization; real bugs (mask / head-offset / scale) blow far past this.
    assert jnp.allclose(out, ref, atol=1e-3, rtol=1e-3), "mismatch vs reference"

    print("KERNEL_OK")
</pallas_src>

<mosaic_0001>
module attributes {stable_mosaic.version = 11 : i64} {
  func.func @_linear_kernel(%arg0: i32, %arg1: i32, %arg2: i32, %arg3: memref<16x32xf32, #tpu.memory_space<vmem>>, %arg4: memref<96x32xf32, #tpu.memory_space<vmem>>, %arg5: memref<1x96xf32, #tpu.memory_space<vmem>>, %arg6: memref<16x96xf32, #tpu.memory_space<vmem>>, %arg7: memref<16x96xf32, #tpu.memory_space<vmem>>) attributes {dimension_semantics = [#tpu.dimension_semantics<parallel>, #tpu.dimension_semantics<parallel>, #tpu.dimension_semantics<arbitrary>], iteration_bounds = array<i64: 1, 1, 1>, scalar_prefetch = 0 : i64, scratch_operands = 1 : i64, tpu.core_type = #tpu.core_type<tc>, window_params = [{transform_indices = @transform_0, window_bounds = array<i64: 16, 32>}, {transform_indices = @transform_1, window_bounds = array<i64: 96, 32>}, {transform_indices = @transform_2, window_bounds = array<i64: 1, 96>}, {transform_indices = @transform_3, window_bounds = array<i64: 16, 96>}]} {
    %c0_i32 = arith.constant 0 : i32
    %0 = arith.cmpi eq, %arg2, %c0_i32 : i32
    %1 = arith.extui %0 : i1 to i32
    %c0_i32_0 = arith.constant 0 : i32
    %2 = arith.cmpi ne, %1, %c0_i32_0 : i32
    scf.if %2 {
      %cst_10 = arith.constant 0.000000e+00 : f32
      %12 = vector.broadcast %cst_10 : f32 to vector<16x96xf32>
      %c0_11 = arith.constant 0 : index
      %c0_12 = arith.constant 0 : index
      %13 = vector.load %arg7[%c0_11, %c0_12] : memref<16x96xf32, #tpu.memory_space<vmem>>, vector<16x96xf32>
      tpu.vector_store %arg7[%c0_11, %c0_12], %12 {strides = array<i32>} : memref<16x96xf32, #tpu.memory_space<vmem>>, vector<16x96xf32>,
    } else {
    }
    %c0 = arith.constant 0 : index
    %c0_1 = arith.constant 0 : index
    %3 = vector.load %arg7[%c0, %c0_1] : memref<16x96xf32, #tpu.memory_space<vmem>>, vector<16x96xf32>
    %c0_2 = arith.constant 0 : index
    %c0_3 = arith.constant 0 : index
    %4 = vector.load %arg3[%c0_2, %c0_3] : memref<16x32xf32, #tpu.memory_space<vmem>>, vector<16x32xf32>
    %c0_4 = arith.constant 0 : index
    %c0_5 = arith.constant 0 : index
    %5 = vector.load %arg4[%c0_4, %c0_5] : memref<96x32xf32, #tpu.memory_space<vmem>>, vector<96x32xf32>
    %cst = arith.constant dense<0.000000e+00> : vector<16x96xf32>
    %6 = tpu.matmul %4, %5, %cst {dimension_numbers = #tpu.dot_dimension_numbers<[1], [1], [0], [0], [0, 0, 1, 0], [], []>} : vector<16x32xf32>, vector<96x32xf32>, vector<16x96xf32> -> vector<16x96xf32>
    %7 = arith.addf %3, %6 : vector<16x96xf32>
    %c0_6 = arith.constant 0 : index
    %c0_7 = arith.constant 0 : index
    %8 = vector.load %arg7[%c0_6, %c0_7] : memref<16x96xf32, #tpu.memory_space<vmem>>, vector<16x96xf32>
    tpu.vector_store %arg7[%c0_6, %c0_7], %7 {strides = array<i32>} : memref<16x96xf32, #tpu.memory_space<vmem>>, vector<16x96xf32>,
    %c0_i32_8 = arith.constant 0 : i32
    %9 = arith.cmpi eq, %arg2, %c0_i32_8 : i32
    %10 = arith.extui %9 : i1 to i32
    %c0_i32_9 = arith.constant 0 : i32
    %11 = arith.cmpi ne, %10, %c0_i32_9 : i32
    scf.if %11 {
      %c0_10 = arith.constant 0 : index
      %c0_11 = arith.constant 0 : index
      %12 = vector.load %arg7[%c0_10, %c0_11] : memref<16x96xf32, #tpu.memory_space<vmem>>, vector<16x96xf32>
      %c0_12 = arith.constant 0 : index
      %c0_13 = arith.constant 0 : index
      %13 = vector.load %arg5[%c0_12, %c0_13] : memref<1x96xf32, #tpu.memory_space<vmem>>, vector<1x96xf32>
      %14 = vector.broadcast %13 : vector<1x96xf32> to vector<16x96xf32>
      %15 = arith.addf %12, %14 : vector<16x96xf32>
      %c0_14 = arith.constant 0 : index
      %c0_15 = arith.constant 0 : index
      %16 = vector.load %arg6[%c0_14, %c0_15] : memref<16x96xf32, #tpu.memory_space<vmem>>, vector<16x96xf32>
      tpu.vector_store %arg6[%c0_14, %c0_15], %15 {strides = array<i32>} : memref<16x96xf32, #tpu.memory_space<vmem>>, vector<16x96xf32>,
    } else {
    }
    return
  }
  func.func @transform_0(%arg0: i32, %arg1: i32, %arg2: i32) -> (i32, i32) {
    %c0_i32 = arith.constant 0 : i32
    return %arg0, %arg2 : i32, i32
  }
  func.func @transform_1(%arg0: i32, %arg1: i32, %arg2: i32) -> (i32, i32) {
    %c0_i32 = arith.constant 0 : i32
    return %arg1, %arg2 : i32, i32
  }
  func.func @transform_2(%arg0: i32, %arg1: i32, %arg2: i32) -> (i32, i32) {
    %c0_i32 = arith.constant 0 : i32
    %c0_i32_0 = arith.constant 0 : i32
    return %c0_i32, %arg1 : i32, i32
  }
  func.func @transform_3(%arg0: i32, %arg1: i32, %arg2: i32) -> (i32, i32) {
    %c0_i32 = arith.constant 0 : i32
    return %arg0, %arg1 : i32, i32
  }
}

module attributes {stable_mosaic.version = 11 : i64} {
  func.func @_linear_kernel(%arg0: i32, %arg1: i32, %arg2: i32, %arg3: memref<16x32xf32, #tpu.memory_space<vmem>>, %arg4: memref<32x32xf32, #tpu.memory_space<vmem>>, %arg5: memref<1x32xf32, #tpu.memory_space<vmem>>, %arg6: memref<16x32xf32, #tpu.memory_space<vmem>>, %arg7: memref<16x32xf32, #tpu.memory_space<vmem>>) attributes {dimension_semantics = [#tpu.dimension_semantics<parallel>, #tpu.dimension_semantics<parallel>, #tpu.dimension_semantics<arbitrary>], iteration_bounds = array<i64: 1, 1, 1>, scalar_prefetch = 0 : i64, scratch_operands = 1 : i64, tpu.core_type = #tpu.core_type<tc>, window_params = [{transform_indices = @transform_0, window_bounds = array<i64: 16, 32>}, {transform_indices = @transform_1, window_bounds = array<i64: 32, 32>}, {transform_indices = @transform_2, window_bounds = array<i64: 1, 32>}, {transform_indices = @transform_3, window_bounds = array<i64: 16, 32>}]} {
    %c0_i32 = arith.constant 0 : i32
    %0 = arith.cmpi eq, %arg2, %c0_i32 : i32
    %1 = arith.extui %0 : i1 to i32
    %c0_i32_0 = arith.constant 0 : i32
    %2 = arith.cmpi ne, %1, %c0_i32_0 : i32
    scf.if %2 {
      %cst_10 = arith.constant 0.000000e+00 : f32
      %12 = vector.broadcast %cst_10 : f32 to vector<16x32xf32>
      %c0_11 = arith.constant 0 : index
      %c0_12 = arith.constant 0 : index
      %13 = vector.load %arg7[%c0_11, %c0_12] : memref<16x32xf32, #tpu.memory_space<vmem>>, vector<16x32xf32>
      tpu.vector_store %arg7[%c0_11, %c0_12], %12 {strides = array<i32>} : memref<16x32xf32, #tpu.memory_space<vmem>>, vector<16x32xf32>,
    } else {
    }
    %c0 = arith.constant 0 : index
    %c0_1 = arith.constant 0 : index
    %3 = vector.load %arg7[%c0, %c0_1] : memref<16x32xf32, #tpu.memory_space<vmem>>, vector<16x32xf32>
    %c0_2 = arith.constant 0 : index
    %c0_3 = arith.constant 0 : index
    %4 = vector.load %arg3[%c0_2, %c0_3] : memref<16x32xf32, #tpu.memory_space<vmem>>, vector<16x32xf32>
    %c0_4 = arith.constant 0 : index
    %c0_5 = arith.constant 0 : index
    %5 = vector.load %arg4[%c0_4, %c0_5] : memref<32x32xf32, #tpu.memory_space<vmem>>, vector<32x32xf32>
    %cst = arith.constant dense<0.000000e+00> : vector<16x32xf32>
    %6 = tpu.matmul %4, %5, %cst {dimension_numbers = #tpu.dot_dimension_numbers<[1], [1], [0], [0], [0, 0, 1, 0], [], []>} : vector<16x32xf32>, vector<32x32xf32>, vector<16x32xf32> -> vector<16x32xf32>
    %7 = arith.addf %3, %6 : vector<16x32xf32>
    %c0_6 = arith.constant 0 : index
    %c0_7 = arith.constant 0 : index
    %8 = vector.load %arg7[%c0_6, %c0_7] : memref<16x32xf32, #tpu.memory_space<vmem>>, vector<16x32xf32>
    tpu.vector_store %arg7[%c0_6, %c0_7], %7 {strides = array<i32>} : memref<16x32xf32, #tpu.memory_space<vmem>>, vector<16x32xf32>,
    %c0_i32_8 = arith.constant 0 : i32
    %9 = arith.cmpi eq, %arg2, %c0_i32_8 : i32
    %10 = arith.extui %9 : i1 to i32
    %c0_i32_9 = arith.constant 0 : i32
    %11 = arith.cmpi ne, %10, %c0_i32_9 : i32
    scf.if %11 {
      %c0_10 = arith.constant 0 : index
      %c0_11 = arith.constant 0 : index
      %12 = vector.load %arg7[%c0_10, %c0_11] : memref<16x32xf32, #tpu.memory_space<vmem>>, vector<16x32xf32>
      %c0_12 = arith.constant 0 : index
      %c0_13 = arith.constant 0 : index
      %13 = vector.load %arg5[%c0_12, %c0_13] : memref<1x32xf32, #tpu.memory_space<vmem>>, vector<1x32xf32>
      %14 = vector.broadcast %13 : vector<1x32xf32> to vector<16x32xf32>
      %15 = arith.addf %12, %14 : vector<16x32xf32>
      %c0_14 = arith.constant 0 : index
      %c0_15 = arith.constant 0 : index
      %16 = vector.load %arg6[%c0_14, %c0_15] : memref<16x32xf32, #tpu.memory_space<vmem>>, vector<16x32xf32>
      tpu.vector_store %arg6[%c0_14, %c0_15], %15 {strides = array<i32>} : memref<16x32xf32, #tpu.memory_space<vmem>>, vector<16x32xf32>,
    } else {
    }
    return
  }
  func.func @transform_0(%arg0: i32, %arg1: i32, %arg2: i32) -> (i32, i32) {
    %c0_i32 = arith.constant 0 : i32
    return %arg0, %arg2 : i32, i32
  }
  func.func @transform_1(%arg0: i32, %arg1: i32, %arg2: i32) -> (i32, i32) {
    %c0_i32 = arith.constant 0 : i32
    return %arg1, %arg2 : i32, i32
  }
  func.func @transform_2(%arg0: i32, %arg1: i32, %arg2: i32) -> (i32, i32) {
    %c0_i32 = arith.constant 0 : i32
    %c0_i32_0 = arith.constant 0 : i32
    return %c0_i32, %arg1 : i32, i32
  }
  func.func @transform_3(%arg0: i32, %arg1: i32, %arg2: i32) -> (i32, i32) {
    %c0_i32 = arith.constant 0 : i32
    return %arg0, %arg1 : i32, i32
  }
}

module attributes {stable_mosaic.version = 11 : i64} {
  func.func @_flash_attn_kernel(%arg0: i32, %arg1: i32, %arg2: i32, %arg3: memref<1x8x96xf32, #tpu.memory_space<vmem>>, %arg4: memref<1x8x96xf32, #tpu.memory_space<vmem>>, %arg5: memref<1x8x32xf32, #tpu.memory_space<vmem>>, %arg6: memref<4x8x1xf32, #tpu.memory_space<vmem>>, %arg7: memref<4x8x1xf32, #tpu.memory_space<vmem>>, %arg8: memref<4x8x8xf32, #tpu.memory_space<vmem>>) attributes {dimension_semantics = [#tpu.dimension_semantics<parallel>, #tpu.dimension_semantics<parallel>, #tpu.dimension_semantics<arbitrary>], iteration_bounds = array<i64: 2, 1, 1>, scalar_prefetch = 0 : i64, scratch_operands = 3 : i64, tpu.core_type = #tpu.core_type<tc>, window_params = [{transform_indices = @transform_0, window_bounds = array<i64: 1, 8, 96>}, {transform_indices = @transform_1, window_bounds = array<i64: 1, 8, 96>}, {transform_indices = @transform_2, window_bounds = array<i64: 1, 8, 32>}]} {
    %c0_i32 = arith.constant 0 : i32
    %0 = arith.cmpi eq, %arg2, %c0_i32 : i32
    %1 = arith.extui %0 : i1 to i32
    %c0_i32_0 = arith.constant 0 : i32
    %2 = arith.cmpi ne, %1, %c0_i32_0 : i32
    scf.if %2 {
      %cst = arith.constant -1.000000e+30 : f32
      %12 = vector.broadcast %cst : f32 to vector<4x8x1xf32>
      %c0 = arith.constant 0 : index
      %c0_5 = arith.constant 0 : index
      %c0_6 = arith.constant 0 : index
      %13 = vector.load %arg6[%c0, %c0_5, %c0_6] : memref<4x8x1xf32, #tpu.memory_space<vmem>>, vector<4x8x1xf32>
      tpu.vector_store %arg6[%c0, %c0_5, %c0_6], %12 {strides = array<i32>} : memref<4x8x1xf32, #tpu.memory_space<vmem>>, vector<4x8x1xf32>,
      %cst_7 = arith.constant 0.000000e+00 : f32
      %14 = vector.broadcast %cst_7 : f32 to vector<4x8x1xf32>
      %c0_8 = arith.constant 0 : index
      %c0_9 = arith.constant 0 : index
      %c0_10 = arith.constant 0 : index
      %15 = vector.load %arg7[%c0_8, %c0_9, %c0_10] : memref<4x8x1xf32, #tpu.memory_space<vmem>>, vector<4x8x1xf32>
      tpu.vector_store %arg7[%c0_8, %c0_9, %c0_10], %14 {strides = array<i32>} : memref<4x8x1xf32, #tpu.memory_space<vmem>>, vector<4x8x1xf32>,
      %cst_11 = arith.constant 0.000000e+00 : f32
      %16 = vector.broadcast %cst_11 : f32 to vector<4x8x8xf32>
      %c0_12 = arith.constant 0 : index
      %c0_13 = arith.constant 0 : index
      %c0_14 = arith.constant 0 : index
      %17 = vector.load %arg8[%c0_12, %c0_13, %c0_14] : memref<4x8x8xf32, #tpu.memory_space<vmem>>, vector<4x8x8xf32>
      tpu.vector_store %arg8[%c0_12, %c0_13, %c0_14], %16 {strides = array<i32>} : memref<4x8x8xf32, #tpu.memory_space<vmem>>, vector<4x8x8xf32>,
    } else {
    }
    %c8_i32 = arith.constant 8 : i32
    %3 = arith.muli %arg2, %c8_i32 : i32
    %c1_i32 = arith.constant 1 : i32
    %4 = arith.addi %arg1, %c1_i32 : i32
    %c8_i32_1 = arith.constant 8 : i32
    %5 = arith.muli %4, %c8_i32_1 : i32
    %6 = arith.cmpi slt, %3, %5 : i32
    %7 = arith.extui %6 : i1 to i32
    %c0_i32_2 = arith.constant 0 : i32
    %8 = arith.cmpi ne, %7, %c0_i32_2 : i32
    scf.if %8 {
      %c0 = arith.constant 0 : index
      %c0_5 = arith.constant 0 : index
      %c0_6 = arith.constant 0 : index
      %12 = vector.load %arg3[%c0, %c0_5, %c0_6] : memref<1x8x96xf32, #tpu.memory_space<vmem>>, vector<1x8x96xf32>
      %13 = vector.shape_cast %12 : vector<1x8x96xf32> to vector<8x96xf32>
      %c0_7 = arith.constant 0 : index
      %c0_8 = arith.constant 0 : index
      %c0_9 = arith.constant 0 : index
      %14 = vector.load %arg4[%c0_7, %c0_8, %c0_9] : memref<1x8x96xf32, #tpu.memory_space<vmem>>, vector<1x8x96xf32>
      %15 = vector.shape_cast %14 : vector<1x8x96xf32> to vector<8x96xf32>
      %c8_i32_10 = arith.constant 8 : i32
      %16 = arith.muli %arg1, %c8_i32_10 : i32
      %17 = tpu.iota {dimensions = array<i32: 0>} : vector<8x8xi32>
      %18 = vector.broadcast %16 : i32 to vector<8x8xi32>
      %19 = arith.addi %18, %17 : vector<8x8xi32>
      %c8_i32_11 = arith.constant 8 : i32
      %20 = arith.muli %arg2, %c8_i32_11 : i32
      %21 = tpu.iota {dimensions = array<i32: 1>} : vector<8x8xi32>
      %22 = vector.broadcast %20 : i32 to vector<8x8xi32>
      %23 = arith.addi %22, %21 : vector<8x8xi32>
      %24 = arith.cmpi sle, %23, %19 : vector<8x8xi32>
      %25 = vector.extract_strided_slice %13 {offsets = [0, 0], sizes = [8, 8], strides = [1, 1]} : vector<8x96xf32> to vector<8x8xf32>
      %cst = arith.constant 0.353553385 : f32
      %26 = vector.broadcast %cst : f32 to vector<8x8xf32>
      %27 = arith.mulf %25, %26 : vector<8x8xf32>
      %28 = vector.extract_strided_slice %15 {offsets = [0, 32], sizes = [8, 8], strides = [1, 1]} : vector<8x96xf32> to vector<8x8xf32>
      %29 = vector.extract_strided_slice %15 {offsets = [0, 64], sizes = [8, 8], strides = [1, 1]} : vector<8x96xf32> to vector<8x8xf32>
      %cst_12 = arith.constant dense<0.000000e+00> : vector<8x8xf32>
      %30 = tpu.matmul %27, %28, %cst_12 {dimension_numbers = #tpu.dot_dimension_numbers<[1], [1], [0], [0], [0, 0, 1, 0], [], []>} : vector<8x8xf32>, vector<8x8xf32>, vector<8x8xf32> -> vector<8x8xf32>
      %cst_13 = arith.constant -1.000000e+30 : f32
      %31 = vector.broadcast %cst_13 : f32 to vector<8x8xf32>
      %32 = arith.select %24, %30, %31 : vector<8x8xi1>, vector<8x8xf32>
      %c0_14 = arith.constant 0 : index
      %c0_15 = arith.constant 0 : index
      %c0_16 = arith.constant 0 : index
      %33 = vector.load %arg6[%c0_14, %c0_15, %c0_16] : memref<4x8x1xf32, #tpu.memory_space<vmem>>, vector<1x8x1xf32>
      %34 = vector.shape_cast %33 : vector<1x8x1xf32> to vector<8x1xf32>
      %cst_17 = arith.constant dense<0xFF800000> : vector<8xf32>
      %35 = vector.multi_reduction <maximumf>, %32, %cst_17 [1] : vector<8x8xf32> to vector<8xf32>
      %36 = vector.shape_cast %35 : vector<8xf32> to vector<8x1xf32>
      %37 = arith.maximumf %34, %36 : vector<8x1xf32>
      %38 = arith.subf %34, %37 : vector<8x1xf32>
      %39 = math.exp %38 : vector<8x1xf32>
      %40 = vector.broadcast %37 : vector<8x1xf32> to vector<8x8xf32>
      %41 = arith.subf %32, %40 : vector<8x8xf32>
      %42 = math.exp %41 : vector<8x8xf32>
      %c0_18 = arith.constant 0 : index
      %c0_19 = arith.constant 0 : index
      %c0_20 = arith.constant 0 : index
      %43 = vector.load %arg7[%c0_18, %c0_19, %c0_20] : memref<4x8x1xf32, #tpu.memory_space<vmem>>, vector<1x8x1xf32>
      %44 = vector.shape_cast %43 : vector<1x8x1xf32> to vector<8x1xf32>
      %45 = arith.mulf %39, %44 : vector<8x1xf32>
      %cst_21 = arith.constant dense<0.000000e+00> : vector<8xf32>
      %46 = vector.multi_reduction <add>, %42, %cst_21 [1] : vector<8x8xf32> to vector<8xf32>
      %47 = vector.shape_cast %46 : vector<8xf32> to vector<8x1xf32>
      %48 = arith.addf %45, %47 : vector<8x1xf32>
      %c0_22 = arith.constant 0 : index
      %c0_23 = arith.constant 0 : index
      %c0_24 = arith.constant 0 : index
      %49 = vector.load %arg7[%c0_22, %c0_23, %c0_24] : memref<4x8x1xf32, #tpu.memory_space<vmem>>, vector<1x8x1xf32>
      %50 = vector.shape_cast %49 : vector<1x8x1xf32> to vector<8x1xf32>
      %51 = vector.shape_cast %48 : vector<8x1xf32> to vector<1x8x1xf32>
      tpu.vector_store %arg7[%c0_22, %c0_23, %c0_24], %51 {strides = array<i32>} : memref<4x8x1xf32, #tpu.memory_space<vmem>>, vector<1x8x1xf32>,
      %c0_25 = arith.constant 0 : index
      %c0_26 = arith.constant 0 : index
      %c0_27 = arith.constant 0 : index
      %52 = vector.load %arg8[%c0_25, %c0_26, %c0_27] : memref<4x8x8xf32, #tpu.memory_space<vmem>>, vector<1x8x8xf32>
      %53 = vector.shape_cast %52 : vector<1x8x8xf32> to vector<8x8xf32>
      %54 = vector.broadcast %39 : vector<8x1xf32> to vector<8x8xf32>
      %55 = arith.mulf %54, %53 : vector<8x8xf32>
      %cst_28 = arith.constant dense<0.000000e+00> : vector<8x8xf32>
      %56 = tpu.matmul %42, %29, %cst_28 {dimension_numbers = #tpu.dot_dimension_numbers<[1], [0], [0], [1], [0, 0, 1, 1], [], []>} : vector<8x8xf32>, vector<8x8xf32>, vector<8x8xf32> -> vector<8x8xf32>
      %57 = arith.addf %55, %56 : vector<8x8xf32>
      %c0_29 = arith.constant 0 : index
      %c0_30 = arith.constant 0 : index
      %c0_31 = arith.constant 0 : index
      %58 = vector.load %arg8[%c0_29, %c0_30, %c0_31] : memref<4x8x8xf32, #tpu.memory_space<vmem>>, vector<1x8x8xf32>
      %59 = vector.shape_cast %58 : vector<1x8x8xf32> to vector<8x8xf32>
      %60 = vector.shape_cast %57 : vector<8x8xf32> to vector<1x8x8xf32>
      tpu.vector_store %arg8[%c0_29, %c0_30, %c0_31], %60 {strides = array<i32>} : memref<4x8x8xf32, #tpu.memory_space<vmem>>, vector<1x8x8xf32>,
      %c0_32 = arith.constant 0 : index
      %c0_33 = arith.constant 0 : index
      %c0_34 = arith.constant 0 : index
      %61 = vector.load %arg6[%c0_32, %c0_33, %c0_34] : memref<4x8x1xf32, #tpu.memory_space<vmem>>, vector<1x8x1xf32>
      %62 = vector.shape_cast %61 : vector<1x8x1xf32> to vector<8x1xf32>
      %63 = vector.shape_cast %37 : vector<8x1xf32> to vector<1x8x1xf32>
      tpu.vector_store %arg6[%c0_32, %c0_33, %c0_34], %63 {strides = array<i32>} : memref<4x8x1xf32, #tpu.memory_space<vmem>>, vector<1x8x1xf32>,
      %64 = vector.extract_strided_slice %13 {offsets = [0, 8], sizes = [8, 8], strides = [1, 1]} : vector<8x96xf32> to vector<8x8xf32>
      %cst_35 = arith.constant 0.353553385 : f32
      %65 = vector.broadcast %cst_35 : f32 to vector<8x8xf32>
      %66 = arith.mulf %64, %65 : vector<8x8xf32>
      %67 = vector.extract_strided_slice %15 {offsets = [0, 40], sizes = [8, 8], strides = [1, 1]} : vector<8x96xf32> to vector<8x8xf32>
      %68 = vector.extract_strided_slice %15 {offsets = [0, 72], sizes = [8, 8], strides = [1, 1]} : vector<8x96xf32> to vector<8x8xf32>
      %cst_36 = arith.constant dense<0.000000e+00> : vector<8x8xf32>
      %69 = tpu.matmul %66, %67, %cst_36 {dimension_numbers = #tpu.dot_dimension_numbers<[1], [1], [0], [0], [0, 0, 1, 0], [], []>} : vector<8x8xf32>, vector<8x8xf32>, vector<8x8xf32> -> vector<8x8xf32>
      %cst_37 = arith.constant -1.000000e+30 : f32
      %70 = vector.broadcast %cst_37 : f32 to vector<8x8xf32>
      %71 = arith.select %24, %69, %70 : vector<8x8xi1>, vector<8x8xf32>
      %c1 = arith.constant 1 : index
      %c0_38 = arith.constant 0 : index
      %c0_39 = arith.constant 0 : index
      %72 = vector.load %arg6[%c1, %c0_38, %c0_39] : memref<4x8x1xf32, #tpu.memory_space<vmem>>, vector<1x8x1xf32>
      %73 = vector.shape_cast %72 : vector<1x8x1xf32> to vector<8x1xf32>
      %cst_40 = arith.constant dense<0xFF800000> : vector<8xf32>
      %74 = vector.multi_reduction <maximumf>, %71, %cst_40 [1] : vector<8x8xf32> to vector<8xf32>
      %75 = vector.shape_cast %74 : vector<8xf32> to vector<8x1xf32>
      %76 = arith.maximumf %73, %75 : vector<8x1xf32>
      %77 = arith.subf %73, %76 : vector<8x1xf32>
      %78 = math.exp %77 : vector<8x1xf32>
      %79 = vector.broadcast %76 : vector<8x1xf32> to vector<8x8xf32>
      %80 = arith.subf %71, %79 : vector<8x8xf32>
      %81 = math.exp %80 : vector<8x8xf32>
      %c1_41 = arith.constant 1 : index
      %c0_42 = arith.constant 0 : index
      %c0_43 = arith.constant 0 : index
      %82 = vector.load %arg7[%c1_41, %c0_42, %c0_43] : memref<4x8x1xf32, #tpu.memory_space<vmem>>, vector<1x8x1xf32>
      %83 = vector.shape_cast %82 : vector<1x8x1xf32> to vector<8x1xf32>
      %84 = arith.mulf %78, %83 : vector<8x1xf32>
      %cst_44 = arith.constant dense<0.000000e+00> : vector<8xf32>
      %85 = vector.multi_reduction <add>, %81, %cst_44 [1] : vector<8x8xf32> to vector<8xf32>
      %86 = vector.shape_cast %85 : vector<8xf32> to vector<8x1xf32>
      %87 = arith.addf %84, %86 : vector<8x1xf32>
      %c1_45 = arith.constant 1 : index
      %c0_46 = arith.constant 0 : index
      %c0_47 = arith.constant 0 : index
      %88 = vector.load %arg7[%c1_45, %c0_46, %c0_47] : memref<4x8x1xf32, #tpu.memory_space<vmem>>, vector<1x8x1xf32>
      %89 = vector.shape_cast %88 : vector<1x8x1xf32> to vector<8x1xf32>
      %90 = vector.shape_cast %87 : vector<8x1xf32> to vector<1x8x1xf32>
      tpu.vector_store %arg7[%c1_45, %c0_46, %c0_47], %90 {strides = array<i32>} : memref<4x8x1xf32, #tpu.memory_space<vmem>>, vector<1x8x1xf32>,
      %c1_48 = arith.constant 1 : index
      %c0_49 = arith.constant 0 : index
      %c0_50 = arith.constant 0 : index
      %91 = vector.load %arg8[%c1_48, %c0_49, %c0_50] : memref<4x8x8xf32, #tpu.memory_space<vmem>>, vector<1x8x8xf32>
      %92 = vector.shape_cast %91 : vector<1x8x8xf32> to vector<8x8xf32>
      %93 = vector.broadcast %78 : vector<8x1xf32> to vector<8x8xf32>
      %94 = arith.mulf %93, %92 : vector<8x8xf32>
      %cst_51 = arith.constant dense<0.000000e+00> : vector<8x8xf32>
      %95 = tpu.matmul %81, %68, %cst_51 {dimension_numbers = #tpu.dot_dimension_numbers<[1], [0], [0], [1], [0, 0, 1, 1], [], []>} : vector<8x8xf32>, vector<8x8xf32>, vector<8x8xf32> -> vector<8x8xf32>
      %96 = arith.addf %94, %95 : vector<8x8xf32>
      %c1_52 = arith.constant 1 : index
      %c0_53 = arith.constant 0 : index
      %c0_54 = arith.constant 0 : index
      %97 = vector.load %arg8[%c1_52, %c0_53, %c0_54] : memref<4x8x8xf32, #tpu.memory_space<vmem>>, vector<1x8x8xf32>
      %98 = vector.shape_cast %97 : vector<1x8x8xf32> to vector<8x8xf32>
      %99 = vector.shape_cast %96 : vector<8x8xf32> to vector<1x8x8xf32>
      tpu.vector_store %arg8[%c1_52, %c0_53, %c0_54], %99 {strides = array<i32>} : memref<4x8x8xf32, #tpu.memory_space<vmem>>, vector<1x8x8xf32>,
      %c1_55 = arith.constant 1 : index
      %c0_56 = arith.constant 0 : index
      %c0_57 = arith.constant 0 : index
      %100 = vector.load %arg6[%c1_55, %c0_56, %c0_57] : memref<4x8x1xf32, #tpu.memory_space<vmem>>, vector<1x8x1xf32>
      %101 = vector.shape_cast %100 : vector<1x8x1xf32> to vector<8x1xf32>
      %102 = vector.shape_cast %76 : vector<8x1xf32> to vector<1x8x1xf32>
      tpu.vector_store %arg6[%c1_55, %c0_56, %c0_57], %102 {strides = array<i32>} : memref<4x8x1xf32, #tpu.memory_space<vmem>>, vector<1x8x1xf32>,
      %103 = vector.extract_strided_slice %13 {offsets = [0, 16], sizes = [8, 8], strides = [1, 1]} : vector<8x96xf32> to vector<8x8xf32>
      %cst_58 = arith.constant 0.353553385 : f32
      %104 = vector.broadcast %cst_58 : f32 to vector<8x8xf32>
      %105 = arith.mulf %103, %104 : vector<8x8xf32>
      %106 = vector.extract_strided_slice %15 {offsets = [0, 48], sizes = [8, 8], strides = [1, 1]} : vector<8x96xf32> to vector<8x8xf32>
      %107 = vector.extract_strided_slice %15 {offsets = [0, 80], sizes = [8, 8], strides = [1, 1]} : vector<8x96xf32> to vector<8x8xf32>
      %cst_59 = arith.constant dense<0.000000e+00> : vector<8x8xf32>
      %108 = tpu.matmul %105, %106, %cst_59 {dimension_numbers = #tpu.dot_dimension_numbers<[1], [1], [0], [0], [0, 0, 1, 0], [], []>} : vector<8x8xf32>, vector<8x8xf32>, vector<8x8xf32> -> vector<8x8xf32>
      %cst_60 = arith.constant -1.000000e+30 : f32
      %109 = vector.broadcast %cst_60 : f32 to vector<8x8xf32>
      %110 = arith.select %24, %108, %109 : vector<8x8xi1>, vector<8x8xf32>
      %c2 = arith.constant 2 : index
      %c0_61 = arith.constant 0 : index
      %c0_62 = arith.constant 0 : index
      %111 = vector.load %arg6[%c2, %c0_61, %c0_62] : memref<4x8x1xf32, #tpu.memory_space<vmem>>, vector<1x8x1xf32>
      %112 = vector.shape_cast %111 : vector<1x8x1xf32> to vector<8x1xf32>
      %cst_63 = arith.constant dense<0xFF800000> : vector<8xf32>
      %113 = vector.multi_reduction <maximumf>, %110, %cst_63 [1] : vector<8x8xf32> to vector<8xf32>
      %114 = vector.shape_cast %113 : vector<8xf32> to vector<8x1xf32>
      %115 = arith.maximumf %112, %114 : vector<8x1xf32>
      %116 = arith.subf %112, %115 : vector<8x1xf32>
      %117 = math.exp %116 : vector<8x1xf32>
      %118 = vector.broadcast %115 : vector<8x1xf32> to vector<8x8xf32>
      %119 = arith.subf %110, %118 : vector<8x8xf32>
      %120 = math.exp %119 : vector<8x8xf32>
      %c2_64 = arith.constant 2 : index
      %c0_65 = arith.constant 0 : index
      %c0_66 = arith.constant 0 : index
      %121 = vector.load %arg7[%c2_64, %c0_65, %c0_66] : memref<4x8x1xf32, #tpu.memory_space<vmem>>, vector<1x8x1xf32>
      %122 = vector.shape_cast %121 : vector<1x8x1xf32> to vector<8x1xf32>
      %123 = arith.mulf %117, %122 : vector<8x1xf32>
      %cst_67 = arith.constant dense<0.000000e+00> : vector<8xf32>
      %124 = vector.multi_reduction <add>, %120, %cst_67 [1] : vector<8x8xf32> to vector<8xf32>
      %125 = vector.shape_cast %124 : vector<8xf32> to vector<8x1xf32>
      %126 = arith.addf %123, %125 : vector<8x1xf32>
      %c2_68 = arith.constant 2 : index
      %c0_69 = arith.constant 0 : index
      %c0_70 = arith.constant 0 : index
      %127 = vector.load %arg7[%c2_68, %c0_69, %c0_70] : memref<4x8x1xf32, #tpu.memory_space<vmem>>, vector<1x8x1xf32>
      %128 = vector.shape_cast %127 : vector<1x8x1xf32> to vector<8x1xf32>
      %129 = vector.shape_cast %126 : vector<8x1xf32> to vector<1x8x1xf32>
      tpu.vector_store %arg7[%c2_68, %c0_69, %c0_70], %129 {strides = array<i32>} : memref<4x8x1xf32, #tpu.memory_space<vmem>>, vector<1x8x1xf32>,
      %c2_71 = arith.constant 2 : index
      %c0_72 = arith.constant 0 : index
      %c0_73 = arith.constant 0 : index
      %130 = vector.load %arg8[%c2_71, %c0_72, %c0_73] : memref<4x8x8xf32, #tpu.memory_space<vmem>>, vector<1x8x8xf32>
      %131 = vector.shape_cast %130 : vector<1x8x8xf32> to vector<8x8xf32>
      %132 = vector.broadcast %117 : vector<8x1xf32> to vector<8x8xf32>
      %133 = arith.mulf %132, %131 : vector<8x8xf32>
      %cst_74 = arith.constant dense<0.000000e+00> : vector<8x8xf32>
      %134 = tpu.matmul %120, %107, %cst_74 {dimension_numbers = #tpu.dot_dimension_numbers<[1], [0], [0], [1], [0, 0, 1, 1], [], []>} : vector<8x8xf32>, vector<8x8xf32>, vector<8x8xf32> -> vector<8x8xf32>
      %135 = arith.addf %133, %134 : vector<8x8xf32>
      %c2_75 = arith.constant 2 : index
      %c0_76 = arith.constant 0 : index
      %c0_77 = arith.constant 0 : index
      %136 = vector.load %arg8[%c2_75, %c0_76, %c0_77] : memref<4x8x8xf32, #tpu.memory_space<vmem>>, vector<1x8x8xf32>
      %137 = vector.shape_cast %136 : vector<1x8x8xf32> to vector<8x8xf32>
      %138 = vector.shape_cast %135 : vector<8x8xf32> to vector<1x8x8xf32>
      tpu.vector_store %arg8[%c2_75, %c0_76, %c0_77], %138 {strides = array<i32>} : memref<4x8x8xf32, #tpu.memory_space<vmem>>, vector<1x8x8xf32>,
      %c2_78 = arith.constant 2 : index
      %c0_79 = arith.constant 0 : index
      %c0_80 = arith.constant 0 : index
      %139 = vector.load %arg6[%c2_78, %c0_79, %c0_80] : memref<4x8x1xf32, #tpu.memory_space<vmem>>, vector<1x8x1xf32>
      %140 = vector.shape_cast %139 : vector<1x8x1xf32> to vector<8x1xf32>
      %141 = vector.shape_cast %115 : vector<8x1xf32> to vector<1x8x1xf32>
      tpu.vector_store %arg6[%c2_78, %c0_79, %c0_80], %141 {strides = array<i32>} : memref<4x8x1xf32, #tpu.memory_space<vmem>>, vector<1x8x1xf32>,
      %142 = vector.extract_strided_slice %13 {offsets = [0, 24], sizes = [8, 8], strides = [1, 1]} : vector<8x96xf32> to vector<8x8xf32>
      %cst_81 = arith.constant 0.353553385 : f32
      %143 = vector.broadcast %cst_81 : f32 to vector<8x8xf32>
      %144 = arith.mulf %142, %143 : vector<8x8xf32>
      %145 = vector.extract_strided_slice %15 {offsets = [0, 56], sizes = [8, 8], strides = [1, 1]} : vector<8x96xf32> to vector<8x8xf32>
      %146 = vector.extract_strided_slice %15 {offsets = [0, 88], sizes = [8, 8], strides = [1, 1]} : vector<8x96xf32> to vector<8x8xf32>
      %cst_82 = arith.constant dense<0.000000e+00> : vector<8x8xf32>
      %147 = tpu.matmul %144, %145, %cst_82 {dimension_numbers = #tpu.dot_dimension_numbers<[1], [1], [0], [0], [0, 0, 1, 0], [], []>} : vector<8x8xf32>, vector<8x8xf32>, vector<8x8xf32> -> vector<8x8xf32>
      %cst_83 = arith.constant -1.000000e+30 : f32
      %148 = vector.broadcast %cst_83 : f32 to vector<8x8xf32>
      %149 = arith.select %24, %147, %148 : vector<8x8xi1>, vector<8x8xf32>
      %c3 = arith.constant 3 : index
      %c0_84 = arith.constant 0 : index
      %c0_85 = arith.constant 0 : index
      %150 = vector.load %arg6[%c3, %c0_84, %c0_85] : memref<4x8x1xf32, #tpu.memory_space<vmem>>, vector<1x8x1xf32>
      %151 = vector.shape_cast %150 : vector<1x8x1xf32> to vector<8x1xf32>
      %cst_86 = arith.constant dense<0xFF800000> : vector<8xf32>
      %152 = vector.multi_reduction <maximumf>, %149, %cst_86 [1] : vector<8x8xf32> to vector<8xf32>
      %153 = vector.shape_cast %152 : vector<8xf32> to vector<8x1xf32>
      %154 = arith.maximumf %151, %153 : vector<8x1xf32>
      %155 = arith.subf %151, %154 : vector<8x1xf32>
      %156 = math.exp %155 : vector<8x1xf32>
      %157 = vector.broadcast %154 : vector<8x1xf32> to vector<8x8xf32>
      %158 = arith.subf %149, %157 : vector<8x8xf32>
      %159 = math.exp %158 : vector<8x8xf32>
      %c3_87 = arith.constant 3 : index
      %c0_88 = arith.constant 0 : index
      %c0_89 = arith.constant 0 : index
      %160 = vector.load %arg7[%c3_87, %c0_88, %c0_89] : memref<4x8x1xf32, #tpu.memory_space<vmem>>, vector<1x8x1xf32>
      %161 = vector.shape_cast %160 : vector<1x8x1xf32> to vector<8x1xf32>
      %162 = arith.mulf %156, %161 : vector<8x1xf32>
      %cst_90 = arith.constant dense<0.000000e+00> : vector<8xf32>
      %163 = vector.multi_reduction <add>, %159, %cst_90 [1] : vector<8x8xf32> to vector<8xf32>
      %164 = vector.shape_cast %163 : vector<8xf32> to vector<8x1xf32>
      %165 = arith.addf %162, %164 : vector<8x1xf32>
      %c3_91 = arith.constant 3 : index
      %c0_92 = arith.constant 0 : index
      %c0_93 = arith.constant 0 : index
      %166 = vector.load %arg7[%c3_91, %c0_92, %c0_93] : memref<4x8x1xf32, #tpu.memory_space<vmem>>, vector<1x8x1xf32>
      %167 = vector.shape_cast %166 : vector<1x8x1xf32> to vector<8x1xf32>
      %168 = vector.shape_cast %165 : vector<8x1xf32> to vector<1x8x1xf32>
      tpu.vector_store %arg7[%c3_91, %c0_92, %c0_93], %168 {strides = array<i32>} : memref<4x8x1xf32, #tpu.memory_space<vmem>>, vector<1x8x1xf32>,
      %c3_94 = arith.constant 3 : index
      %c0_95 = arith.constant 0 : index
      %c0_96 = arith.constant 0 : index
      %169 = vector.load %arg8[%c3_94, %c0_95, %c0_96] : memref<4x8x8xf32, #tpu.memory_space<vmem>>, vector<1x8x8xf32>
      %170 = vector.shape_cast %169 : vector<1x8x8xf32> to vector<8x8xf32>
      %171 = vector.broadcast %156 : vector<8x1xf32> to vector<8x8xf32>
      %172 = arith.mulf %171, %170 : vector<8x8xf32>
      %cst_97 = arith.constant dense<0.000000e+00> : vector<8x8xf32>
      %173 = tpu.matmul %159, %146, %cst_97 {dimension_numbers = #tpu.dot_dimension_numbers<[1], [0], [0], [1], [0, 0, 1, 1], [], []>} : vector<8x8xf32>, vector<8x8xf32>, vector<8x8xf32> -> vector<8x8xf32>
      %174 = arith.addf %172, %173 : vector<8x8xf32>
      %c3_98 = arith.constant 3 : index
      %c0_99 = arith.constant 0 : index
      %c0_100 = arith.constant 0 : index
      %175 = vector.load %arg8[%c3_98, %c0_99, %c0_100] : memref<4x8x8xf32, #tpu.memory_space<vmem>>, vector<1x8x8xf32>
      %176 = vector.shape_cast %175 : vector<1x8x8xf32> to vector<8x8xf32>
      %177 = vector.shape_cast %174 : vector<8x8xf32> to vector<1x8x8xf32>
      tpu.vector_store %arg8[%c3_98, %c0_99, %c0_100], %177 {strides = array<i32>} : memref<4x8x8xf32, #tpu.memory_space<vmem>>, vector<1x8x8xf32>,
      %c3_101 = arith.constant 3 : index
      %c0_102 = arith.constant 0 : index
      %c0_103 = arith.constant 0 : index
      %178 = vector.load %arg6[%c3_101, %c0_102, %c0_103] : memref<4x8x1xf32, #tpu.memory_space<vmem>>, vector<1x8x1xf32>
      %179 = vector.shape_cast %178 : vector<1x8x1xf32> to vector<8x1xf32>
      %180 = vector.shape_cast %154 : vector<8x1xf32> to vector<1x8x1xf32>
      tpu.vector_store %arg6[%c3_101, %c0_102, %c0_103], %180 {strides = array<i32>} : memref<4x8x1xf32, #tpu.memory_space<vmem>>, vector<1x8x1xf32>,
    } else {
    }
    %c0_i32_3 = arith.constant 0 : i32
    %9 = arith.cmpi eq, %arg2, %c0_i32_3 : i32
    %10 = arith.extui %9 : i1 to i32
    %c0_i32_4 = arith.constant 0 : i32
    %11 = arith.cmpi ne, %10, %c0_i32_4 : i32
    scf.if %11 {
      %c0 = arith.constant 0 : index
      %c0_5 = arith.constant 0 : index
      %c0_6 = arith.constant 0 : index
      %12 = vector.load %arg7[%c0, %c0_5, %c0_6] : memref<4x8x1xf32, #tpu.memory_space<vmem>>, vector<1x8x1xf32>
      %13 = vector.shape_cast %12 : vector<1x8x1xf32> to vector<8x1xf32>
      %14 = tpu.reciprocal %13 {approx = true} : vector<8x1xf32> -> vector<8x1xf32>
      %c0_7 = arith.constant 0 : index
      %c0_8 = arith.constant 0 : index
      %c0_9 = arith.constant 0 : index
      %15 = vector.load %arg8[%c0_7, %c0_8, %c0_9] : memref<4x8x8xf32, #tpu.memory_space<vmem>>, vector<1x8x8xf32>
      %16 = vector.shape_cast %15 : vector<1x8x8xf32> to vector<8x8xf32>
      %17 = vector.broadcast %14 : vector<8x1xf32> to vector<8x8xf32>
      %18 = arith.mulf %16, %17 : vector<8x8xf32>
      %c1 = arith.constant 1 : index
      %c0_10 = arith.constant 0 : index
      %c0_11 = arith.constant 0 : index
      %19 = vector.load %arg7[%c1, %c0_10, %c0_11] : memref<4x8x1xf32, #tpu.memory_space<vmem>>, vector<1x8x1xf32>
      %20 = vector.shape_cast %19 : vector<1x8x1xf32> to vector<8x1xf32>
      %21 = tpu.reciprocal %20 {approx = true} : vector<8x1xf32> -> vector<8x1xf32>
      %c1_12 = arith.constant 1 : index
      %c0_13 = arith.constant 0 : index
      %c0_14 = arith.constant 0 : index
      %22 = vector.load %arg8[%c1_12, %c0_13, %c0_14] : memref<4x8x8xf32, #tpu.memory_space<vmem>>, vector<1x8x8xf32>
      %23 = vector.shape_cast %22 : vector<1x8x8xf32> to vector<8x8xf32>
      %24 = vector.broadcast %21 : vector<8x1xf32> to vector<8x8xf32>
      %25 = arith.mulf %23, %24 : vector<8x8xf32>
      %c2 = arith.constant 2 : index
      %c0_15 = arith.constant 0 : index
      %c0_16 = arith.constant 0 : index
      %26 = vector.load %arg7[%c2, %c0_15, %c0_16] : memref<4x8x1xf32, #tpu.memory_space<vmem>>, vector<1x8x1xf32>
      %27 = vector.shape_cast %26 : vector<1x8x1xf32> to vector<8x1xf32>
      %28 = tpu.reciprocal %27 {approx = true} : vector<8x1xf32> -> vector<8x1xf32>
      %c2_17 = arith.constant 2 : index
      %c0_18 = arith.constant 0 : index
      %c0_19 = arith.constant 0 : index
      %29 = vector.load %arg8[%c2_17, %c0_18, %c0_19] : memref<4x8x8xf32, #tpu.memory_space<vmem>>, vector<1x8x8xf32>
      %30 = vector.shape_cast %29 : vector<1x8x8xf32> to vector<8x8xf32>
      %31 = vector.broadcast %28 : vector<8x1xf32> to vector<8x8xf32>
      %32 = arith.mulf %30, %31 : vector<8x8xf32>
      %c3 = arith.constant 3 : index
      %c0_20 = arith.constant 0 : index
      %c0_21 = arith.constant 0 : index
      %33 = vector.load %arg7[%c3, %c0_20, %c0_21] : memref<4x8x1xf32, #tpu.memory_space<vmem>>, vector<1x8x1xf32>
      %34 = vector.shape_cast %33 : vector<1x8x1xf32> to vector<8x1xf32>
      %35 = tpu.reciprocal %34 {approx = true} : vector<8x1xf32> -> vector<8x1xf32>
      %c3_22 = arith.constant 3 : index
      %c0_23 = arith.constant 0 : index
      %c0_24 = arith.constant 0 : index
      %36 = vector.load %arg8[%c3_22, %c0_23, %c0_24] : memref<4x8x8xf32, #tpu.memory_space<vmem>>, vector<1x8x8xf32>
      %37 = vector.shape_cast %36 : vector<1x8x8xf32> to vector<8x8xf32>
      %38 = vector.broadcast %35 : vector<8x1xf32> to vector<8x8xf32>
      %39 = arith.mulf %37, %38 : vector<8x8xf32>
      %40 = tpu.concatenate %18, %25, %32, %39 in 1 : vector<8x8xf32>, vector<8x8xf32>, vector<8x8xf32>, vector<8x8xf32> -> vector<8x32xf32>
      %c0_25 = arith.constant 0 : index
      %c0_26 = arith.constant 0 : index
      %c0_27 = arith.constant 0 : index
      %41 = vector.load %arg5[%c0_25, %c0_26, %c0_27] : memref<1x8x32xf32, #tpu.memory_space<vmem>>, vector<1x8x32xf32>
      %42 = vector.shape_cast %41 : vector<1x8x32xf32> to vector<8x32xf32>
      %43 = vector.shape_cast %40 : vector<8x32xf32> to vector<1x8x32xf32>
      tpu.vector_store %arg5[%c0_25, %c0_26, %c0_27], %43 {strides = array<i32>} : memref<1x8x32xf32, #tpu.memory_space<vmem>>, vector<1x8x32xf32>,
    } else {
    }
    return
  }
  func.func @transform_0(%arg0: i32, %arg1: i32, %arg2: i32) -> (i32, i32, i32) {
    %c0_i32 = arith.constant 0 : i32
    %c0_i32_0 = arith.constant 0 : i32
    return %arg0, %arg1, %c0_i32 : i32, i32, i32
  }
  func.func @transform_1(%arg0: i32, %arg1: i32, %arg2: i32) -> (i32, i32, i32) {
    %c0_i32 = arith.constant 0 : i32
    %c0_i32_0 = arith.constant 0 : i32
    return %arg0, %arg2, %c0_i32 : i32, i32, i32
  }
  func.func @transform_2(%arg0: i32, %arg1: i32, %arg2: i32) -> (i32, i32, i32) {
    %c0_i32 = arith.constant 0 : i32
    %c0_i32_0 = arith.constant 0 : i32
    return %arg0, %arg1, %c0_i32 : i32, i32, i32
  }
}

</mosaic_0001>

<llo_original>
// kernel: causal_self_attention.3
$region0: #{causal_self_attention.3}
  #allocation0 [shape = 'u32[]', space=smem, size = 0x4, offset = 0x4, fixed_abs, tag = 'smem constant byte address 0x4 - core index']
  #allocation1 [shape = 'u32[144,128]{1,0:T(1,128)}', space=vmem, size = 0x12000, scoped, tag = 'internal scratch']
  #allocation2 [shape = 'f32[16,96]{1,0:T(8,128)}', space=vmem, size = 0x2000, scoped, tag = 'scratch operand']
  %s0 = inlined_call_operand.vmem [shape: f32[16,32], index: 0, kind: input, shape index: {}]
  %s1 = inlined_call_operand.vmem [shape: f32[96,32], index: 1, kind: input, shape index: {}]
  %s2 = inlined_call_operand.vmem [shape: f32[1,96], index: 2, kind: input, shape index: {}]
  %s3 = inlined_call_operand.vmem [shape: f32[16,96], index: 3, kind: output, shape index: {}]
  %s4 = sld [smem:[#allocation0]]
  $region30: #{causal_self_attention.3} parent=0
    _
  %s6 = ssub.s32 1, %s4
  %s7 = scalar_select 0, %s6, %s4
  // Predicated region
  $region2: #{causal_self_attention.3} parent=0 // pred_check
    _
  $region3: #{causal_self_attention.3} parent=0 // pred_check_branch
    %9 = sbr.rel (0) target = $region5
  $region4: #{causal_self_attention.3} parent=0 // pred_region
    _
  $region5: #{causal_self_attention.3} parent=0 // pred_fallthru
    _
  // Predicated region
  $region6: #{causal_self_attention.3} parent=0 // pred_check
    _
  $region7: #{causal_self_attention.3} parent=0 // pred_check_branch
    %11 = sbr.rel (0) target = $region9
  $region8: #{causal_self_attention.3} parent=0 // pred_region
    _
  $region9: #{causal_self_attention.3} parent=0 // pred_fallthru
    _
  // Predicated region
  $region10: #{causal_self_attention.3} parent=0 // pred_check
    _
  $region11: #{causal_self_attention.3} parent=0 // pred_check_branch
    %13 = sbr.rel (0) target = $region13
  $region12: #{causal_self_attention.3} parent=0 // pred_region
    _
  $region13: #{causal_self_attention.3} parent=0 // pred_fallthru
    _
  %p14 = scmp.eq.s32.totalorder 0, 0
  // Predicated region
  $region14: #{causal_self_attention.3} parent=0 // pred_check
    %p15 = pneg %p14
  $region15: #{causal_self_attention.3} parent=0 // pred_check_branch
    %17 = sbr.rel (%p15) target = $region17
  $region16: #{causal_self_attention.3} parent=0 // pred_region
    %vm18 = vcmask 785408
    %19 = vst.msk [vmem:[#allocation2] sm:$0xff] %vm18, 0.0
    %20 = vst.msk [vmem:[#allocation2 + $0x8] sm:$0xff] %vm18, 0.0
  $region17: #{causal_self_attention.3} parent=0 // pred_fallthru
    _
  %v21 = vld [vmem:[#allocation2] sm:$0xff]
  %v22 = vld [vmem:[#allocation2 + $0x8] sm:$0xff]
  %v23 = vld [vmem:[%s0] sm:$0xff]
  %v24 = vld [vmem:[%s0 + $0x8] sm:$0xff]
  %v25 = vld [vmem:[%s1] sm:$0xff]
  %v26 = vld [vmem:[%s1 + $0x8] sm:$0xff]
  %v27 = vld [vmem:[%s1 + $0x10] sm:$0xff]
  %v28 = vld [vmem:[%s1 + $0x18] sm:$0xff]
  %v29 = vld [vmem:[%s1 + $0x20] sm:$0xff]
  %v30 = vld [vmem:[%s1 + $0x28] sm:$0xff]
  %v31 = vld [vmem:[%s1 + $0x30] sm:$0xff]
  %v32 = vld [vmem:[%s1 + $0x38] sm:$0xff]
  %v33 = vld [vmem:[%s1 + $0x40] sm:$0xff]
  %v34 = vld [vmem:[%s1 + $0x48] sm:$0xff]
  %v35 = vld [vmem:[%s1 + $0x50] sm:$0xff]
  %v36 = vld [vmem:[%s1 + $0x58] sm:$0xff]
  %vm37 = vcmask 261120
  %v39 = vsel %vm37, %v23, 0
  %v42 = vsel %vm37, %v24, 0
  %v45 = vsel %vm37, %v25, 0
  %v48 = vsel %vm37, %v26, 0
  %v51 = vsel %vm37, %v27, 0
  %v54 = vsel %vm37, %v28, 0
  %v57 = vsel %vm37, %v29, 0
  %v60 = vsel %vm37, %v30, 0
  %v63 = vsel %vm37, %v31, 0
  %v66 = vsel %vm37, %v32, 0
  %v69 = vsel %vm37, %v33, 0
  %v72 = vsel %vm37, %v34, 0
  %v75 = vsel %vm37, %v35, 0
  %v78 = vsel %vm37, %v36, 0
  %80 = vmatprep.subr.mxu0 0.0
  %81 = vmatpush1.xpose.msra.mxu0 %v45
  %82 = vmatprep.subr.mxu0 0.0
  %83 = vmatpush1.xpose.msra.mxu0 %v48
  %84 = vmatprep.subr.mxu0 0.0
  %85 = vmatpush1.xpose.msra.mxu0 %v51
  %86 = vmatprep.subr.mxu0 0.0
  %87 = vmatpush1.xpose.msra.mxu0 %v54
  %88 = vmatprep.subr.mxu0 0.0
  %89 = vmatpush1.xpose.msra.mxu0 %v57
  %90 = vmatprep.subr.mxu0 0.0
  %91 = vmatpush1.xpose.msra.mxu0 %v60
  %92 = vmatprep.subr.mxu0 0.0
  %93 = vmatpush1.xpose.msra.mxu0 %v63
  %94 = vmatprep.subr.mxu0 0.0
  %95 = vmatpush1.xpose.msra.mxu0 %v66
  %96 = vmatprep.subr.mxu0 0.0
  %97 = vmatpush1.xpose.msra.mxu0 %v69
  %98 = vmatprep.subr.mxu0 0.0
  %99 = vmatpush1.xpose.msra.mxu0 %v72
  %100 = vmatprep.subr.mxu0 0.0
  %101 = vmatpush1.xpose.msra.mxu0 %v75
  %102 = vmatprep.subr.mxu0 0.0
  %103 = vmatpush1.xpose.msra.mxu0 %v78
  %104 = vmatprep.subr.mxu0 0.0
  %105 = vmatpush1.xpose.msra.mxu0 0.0
  %106 = vmatprep.subr.mxu0 0.0
  %107 = vmatpush1.xpose.msra.mxu0 0.0
  %108 = vmatprep.subr.mxu0 0.0
  %109 = vmatpush1.xpose.msra.mxu0 0.0
  %110 = vmatprep.subr.mxu0 0.0
  %111 = vmatpush1.xpose.msra.mxu0 0.0
  %112 = vmatprep.subr.mxu0 0.0
  %113 = vmatpush1.xpose.msra.mxu0 0.0
  %114 = vmatprep.subr.mxu0 0.0
  %115 = vmatpush1.xpose.msra.mxu0 0.0
  %116 = vmatprep.subr.mxu0 0.0
  %117 = vmatpush1.xpose.msra.mxu0 0.0
  %118 = vmatprep.subr.mxu0 0.0
  %119 = vmatpush1.xpose.msra.mxu0 0.0
  %120 = vmatprep.subr.mxu0 0.0
  %121 = vmatpush1.xpose.msra.mxu0 0.0
  %122 = vmatprep.subr.mxu0 0.0
  %123 = vmatpush1.xpose.msra.mxu0 0.0
  %124 = vmatprep.subr.mxu0 0.0
  %125 = vmatpush1.xpose.msra.mxu0 0.0
  %126 = vmatprep.subr.mxu0 0.0
  %127 = vmatpush1.xpose.msra.mxu0 0.0
  %128 = vmatprep.subr.mxu0 0.0
  %129 = vmatpush1.xpose.msra.mxu0 0.0
  %130 = vmatprep.subr.mxu0 0.0
  %131 = vmatpush1.xpose.msra.mxu0 0.0
  %132 = vmatprep.subr.mxu0 0.0
  %133 = vmatpush1.xpose.msra.mxu0 0.0
  %134 = vmatprep.subr.mxu0 0.0
  %135 = vmatpush1.xpose.msra.mxu0 0.0
  %136 = vmatprep.subr.mxu0 0.0
  %137 = vmatpush1.xpose.msra.mxu0 0.0
  %138 = vmatprep.subr.mxu0 0.0
  %139 = vmatpush1.xpose.msra.mxu0 0.0
  %140 = vmatprep.subr.mxu0 0.0
  %141 = vmatpush1.xpose.msra.mxu0 0.0
  %142 = vmatprep.subr.mxu0 0.0
  %143 = vmatpush1.xpose.msra.mxu0 0.0
  %144 = vmatprep.mubr.f32.mxu0 0.0
  %145 = vmatmul.mubr.f32.gmra.mrb[0].mxu0 %v39
  %v146 = vpop.f32.mrb[0].mxu0
  %v147 = vadd.f32 0.0, %v146
  %v148 = vpop.f32.mrb[0].mxu0
  %149 = vmatprep.mubr.f32.mxu0 0.0
  %150 = vmatmul.mubr.f32.gmra.mrb[0].mxu0 %v42
  %v151 = vpop.f32.mrb[0].mxu0
  %v152 = vadd.f32 0.0, %v151
  %v153 = vpop.f32.mrb[0].mxu0
  %154 = vdwg.mxu0
  %v155 = vadd.f32 %v21, %v147
  %v156 = vadd.f32 %v22, %v152
  %vm157 = vcmask 785408
  %158 = vst.msk [vmem:[#allocation2] sm:$0xff] %vm157, %v155
  %159 = vst.msk [vmem:[#allocation2 + $0x8] sm:$0xff] %vm157, %v156
  // Predicated region
  $region18: #{causal_self_attention.3} parent=0 // pred_check
    %p160 = pneg %p14
  $region19: #{causal_self_attention.3} parent=0 // pred_check_branch
    %162 = sbr.rel (%p160) target = $region21
  $region20: #{causal_self_attention.3} parent=0 // pred_region
    %v163 = vld [vmem:[#allocation2] sm:$0xff]
    %v164 = vld [vmem:[#allocation2 + $0x8] sm:$0xff]
    %v165 = vld [vmem:[%s2] sm:$0x1]
    %v167 = vlaneseq
    %v168 = vshrl.u32 %v167, 7
    %v169 = vsub.s32 0, %v168
    %v170 = vrot.slane %v165, %v169
    %v172 = vadd.f32 %v163, %v170
    %v173 = vadd.f32 %v164, %v170
    %174 = vst.msk [vmem:[%s3] sm:$0xff] %vm157, %v172
    %175 = vst.msk [vmem:[%s3 + $0x8] sm:$0xff] %vm157, %v173
  $region21: #{causal_self_attention.3} parent=0 // pred_fallthru
    _
  // Predicated region
  $region22: #{causal_self_attention.3} parent=0 // pred_check
    _
  $region23: #{causal_self_attention.3} parent=0 // pred_check_branch
    %177 = sbr.rel (0) target = $region25
  $region24: #{causal_self_attention.3} parent=0 // pred_region
    _
  $region25: #{causal_self_attention.3} parent=0 // pred_fallthru
    _
  // Predicated region
  $region26: #{causal_self_attention.3} parent=0 // pred_check
    _
  $region27: #{causal_self_attention.3} parent=0 // pred_check_branch
    %179 = sbr.rel (0) target = $region29
  $region28: #{causal_self_attention.3} parent=0 // pred_region
    _
  $region29: #{causal_self_attention.3} parent=0 // pred_fallthru
    _

// kernel: causal_self_attention.5
$region0: #{causal_self_attention.5}
  #allocation0 [shape = 'u32[]', space=smem, size = 0x4, offset = 0x4, fixed_abs, tag = 'smem constant byte address 0x4 - core index']
  #allocation1 [shape = 'u32[144,128]{1,0:T(1,128)}', space=vmem, size = 0x12000, scoped, tag = 'internal scratch']
  #allocation2 [shape = 'f32[16,32]{1,0:T(8,128)}', space=vmem, size = 0x2000, scoped, tag = 'scratch operand']
  %s0 = inlined_call_operand.vmem [shape: f32[16,32], index: 0, kind: input, shape index: {}]
  %s1 = inlined_call_operand.vmem [shape: f32[32,32], index: 1, kind: input, shape index: {}]
  %s2 = inlined_call_operand.vmem [shape: f32[1,32], index: 2, kind: input, shape index: {}]
  %s3 = inlined_call_operand.hbm [shape: f32[16,32], index: 3, kind: output, shape index: {}]
  %s4 = sld [smem:[#allocation0]]
  $region30: #{causal_self_attention.5} parent=0
    _
  %s6 = ssub.s32 1, %s4
  %s7 = scalar_select 0, %s6, %s4
  $region1: #{causal_self_attention.5} parent=0
    #allocation3 [shape = 'u8[8192]{0}', space=vmem, size = 0x2000, scoped, tag = 'output window, operand 0, single buffered']
    #allocation4 [shape = 's32[1]{0}', space=sflag, size = 0x4, scoped, tag = 'scoped memory for causal_self_attention.5']
    %8 = vsyncpa [#allocation4], 0
    // Predicated region
    $region2: #{causal_self_attention.5} parent=1 // pred_check
      _
    $region3: #{causal_self_attention.5} parent=1 // pred_check_branch
      %10 = sbr.rel (0) target = $region5
    $region4: #{causal_self_attention.5} parent=1 // pred_region
      _
    $region5: #{causal_self_attention.5} parent=1 // pred_fallthru
      _
    // Predicated region
    $region6: #{causal_self_attention.5} parent=1 // pred_check
      _
    $region7: #{causal_self_attention.5} parent=1 // pred_check_branch
      %12 = sbr.rel (0) target = $region9
    $region8: #{causal_self_attention.5} parent=1 // pred_region
      _
    $region9: #{causal_self_attention.5} parent=1 // pred_fallthru
      _
    // Predicated region
    $region10: #{causal_self_attention.5} parent=1 // pred_check
      _
    $region11: #{causal_self_attention.5} parent=1 // pred_check_branch
      %14 = sbr.rel (0) target = $region13
    $region12: #{causal_self_attention.5} parent=1 // pred_region
      _
    $region13: #{causal_self_attention.5} parent=1 // pred_fallthru
      _
    %p15 = scmp.eq.s32.totalorder 0, 0
    // Predicated region
    $region14: #{causal_self_attention.5} parent=1 // pred_check
      %p16 = pneg %p15
    $region15: #{causal_self_attention.5} parent=1 // pred_check_branch
      %18 = sbr.rel (%p16) target = $region17
    $region16: #{causal_self_attention.5} parent=1 // pred_region
      %vm19 = vcmask 261120
      %20 = vst.msk [vmem:[#allocation2] sm:$0xff] %vm19, 0.0
      %21 = vst.msk [vmem:[#allocation2 + $0x8] sm:$0xff] %vm19, 0.0
    $region17: #{causal_self_attention.5} parent=1 // pred_fallthru
      _
    %v22 = vld [vmem:[#allocation2] sm:$0xff]
    %v23 = vld [vmem:[#allocation2 + $0x8] sm:$0xff]
    %v24 = vld [vmem:[%s0] sm:$0xff]
    %v25 = vld [vmem:[%s0 + $0x8] sm:$0xff]
    %v26 = vld [vmem:[%s1] sm:$0xff]
    %v27 = vld [vmem:[%s1 + $0x8] sm:$0xff]
    %v28 = vld [vmem:[%s1 + $0x10] sm:$0xff]
    %v29 = vld [vmem:[%s1 + $0x18] sm:$0xff]
    %vm30 = vcmask 261120
    %v32 = vsel %vm30, %v24, 0
    %v35 = vsel %vm30, %v25, 0
    %v38 = vsel %vm30, %v26, 0
    %v41 = vsel %vm30, %v27, 0
    %v44 = vsel %vm30, %v28, 0
    %v47 = vsel %vm30, %v29, 0
    %49 = vmatprep.subr.mxu0 0.0
    %50 = vmatpush1.xpose.msra.mxu0 %v38
    %51 = vmatprep.subr.mxu0 0.0
    %52 = vmatpush1.xpose.msra.mxu0 %v41
    %53 = vmatprep.subr.mxu0 0.0
    %54 = vmatpush1.xpose.msra.mxu0 %v44
    %55 = vmatprep.subr.mxu0 0.0
    %56 = vmatpush1.xpose.msra.mxu0 %v47
    %57 = vmatprep.subr.mxu0 0.0
    %58 = vmatpush1.xpose.msra.mxu0 0.0
    %59 = vmatprep.subr.mxu0 0.0
    %60 = vmatpush1.xpose.msra.mxu0 0.0
    %61 = vmatprep.subr.mxu0 0.0
    %62 = vmatpush1.xpose.msra.mxu0 0.0
    %63 = vmatprep.subr.mxu0 0.0
    %64 = vmatpush1.xpose.msra.mxu0 0.0
    %65 = vmatprep.subr.mxu0 0.0
    %66 = vmatpush1.xpose.msra.mxu0 0.0
    %67 = vmatprep.subr.mxu0 0.0
    %68 = vmatpush1.xpose.msra.mxu0 0.0
    %69 = vmatprep.subr.mxu0 0.0
    %70 = vmatpush1.xpose.msra.mxu0 0.0
    %71 = vmatprep.subr.mxu0 0.0
    %72 = vmatpush1.xpose.msra.mxu0 0.0
    %73 = vmatprep.subr.mxu0 0.0
    %74 = vmatpush1.xpose.msra.mxu0 0.0
    %75 = vmatprep.subr.mxu0 0.0
    %76 = vmatpush1.xpose.msra.mxu0 0.0
    %77 = vmatprep.subr.mxu0 0.0
    %78 = vmatpush1.xpose.msra.mxu0 0.0
    %79 = vmatprep.subr.mxu0 0.0
    %80 = vmatpush1.xpose.msra.mxu0 0.0
    %81 = vmatprep.subr.mxu0 0.0
    %82 = vmatpush1.xpose.msra.mxu0 0.0
    %83 = vmatprep.subr.mxu0 0.0
    %84 = vmatpush1.xpose.msra.mxu0 0.0
    %85 = vmatprep.subr.mxu0 0.0
    %86 = vmatpush1.xpose.msra.mxu0 0.0
    %87 = vmatprep.subr.mxu0 0.0
    %88 = vmatpush1.xpose.msra.mxu0 0.0
    %89 = vmatprep.subr.mxu0 0.0
    %90 = vmatpush1.xpose.msra.mxu0 0.0
    %91 = vmatprep.subr.mxu0 0.0
    %92 = vmatpush1.xpose.msra.mxu0 0.0
    %93 = vmatprep.subr.mxu0 0.0
    %94 = vmatpush1.xpose.msra.mxu0 0.0
    %95 = vmatprep.subr.mxu0 0.0
    %96 = vmatpush1.xpose.msra.mxu0 0.0
    %97 = vmatprep.subr.mxu0 0.0
    %98 = vmatpush1.xpose.msra.mxu0 0.0
    %99 = vmatprep.subr.mxu0 0.0
    %100 = vmatpush1.xpose.msra.mxu0 0.0
    %101 = vmatprep.subr.mxu0 0.0
    %102 = vmatpush1.xpose.msra.mxu0 0.0
    %103 = vmatprep.subr.mxu0 0.0
    %104 = vmatpush1.xpose.msra.mxu0 0.0
    %105 = vmatprep.subr.mxu0 0.0
    %106 = vmatpush1.xpose.msra.mxu0 0.0
    %107 = vmatprep.subr.mxu0 0.0
    %108 = vmatpush1.xpose.msra.mxu0 0.0
    %109 = vmatprep.subr.mxu0 0.0
    %110 = vmatpush1.xpose.msra.mxu0 0.0
    %111 = vmatprep.subr.mxu0 0.0
    %112 = vmatpush1.xpose.msra.mxu0 0.0
    %113 = vmatprep.mubr.f32.mxu0 0.0
    %114 = vmatmul.mubr.f32.gmra.mrb[0].mxu0 %v32
    %v115 = vpop.f32.mrb[0].mxu0
    %v116 = vadd.f32 0.0, %v115
    %v117 = vpop.f32.mrb[0].mxu0
    %118 = vmatprep.mubr.f32.mxu0 0.0
    %119 = vmatmul.mubr.f32.gmra.mrb[0].mxu0 %v35
    %v120 = vpop.f32.mrb[0].mxu0
    %v121 = vadd.f32 0.0, %v120
    %v122 = vpop.f32.mrb[0].mxu0
    %123 = vdwg.mxu0
    %v124 = vadd.f32 %v22, %v116
    %v125 = vadd.f32 %v23, %v121
    %126 = vst.msk [vmem:[#allocation2] sm:$0xff] %vm30, %v124
    %127 = vst.msk [vmem:[#allocation2 + $0x8] sm:$0xff] %vm30, %v125
    // Predicated region
    $region18: #{causal_self_attention.5} parent=1 // pred_check
      %p128 = pneg %p15
    $region19: #{causal_self_attention.5} parent=1 // pred_check_branch
      %130 = sbr.rel (%p128) target = $region21
    $region20: #{causal_self_attention.5} parent=1 // pred_region
      %v131 = vld [vmem:[#allocation2] sm:$0xff]
      %v132 = vld [vmem:[#allocation2 + $0x8] sm:$0xff]
      %v133 = vld [vmem:[%s2] sm:$0x1]
      %v135 = vlaneseq
      %v136 = vshrl.u32 %v135, 7
      %v137 = vsub.s32 0, %v136
      %v138 = vrot.slane %v133, %v137
      %v140 = vadd.f32 %v131, %v138
      %v141 = vadd.f32 %v132, %v138
      %142 = vst.msk [vmem:[#allocation3] sm:$0xff] %vm30, %v140
      %143 = vst.msk [vmem:[#allocation3 + $0x8] sm:$0xff] %vm30, %v141
    $region21: #{causal_self_attention.5} parent=1 // pred_fallthru
      _
    // Predicated region
    $region22: #{causal_self_attention.5} parent=1 // pred_check
      _
    $region23: #{causal_self_attention.5} parent=1 // pred_check_branch
      %145 = sbr.rel (0) target = $region25
    $region24: #{causal_self_attention.5} parent=1 // pred_region
      %s147 = ssub.s32 256, 256
      %148 = vsyncadd [#allocation4], %s147
      %s149 = sshll.u32 [#allocation3], 4
      %s150 = int_to_ptr.vmem [resolvable:$true] %s149
      %155 = dma.vmem_to_hbm [thread:$0]  %s150, 256, %s3, [#allocation4], 128, 128, 8
    $region25: #{causal_self_attention.5} parent=1 // pred_fallthru
      _
    // Predicated region
    $region26: #{causal_self_attention.5} parent=1 // pred_check
      _
    $region27: #{causal_self_attention.5} parent=1 // pred_check_branch
      %157 = sbr.rel (0) target = $region29
    $region28: #{causal_self_attention.5} parent=1 // pred_region
      %158 = dma.done [#allocation4], 256
    $region29: #{causal_self_attention.5} parent=1 // pred_fallthru
      _
    %159 = vsyncpa [#allocation4], 1

// kernel: causal_self_attention.4
$region0: #{causal_self_attention.4}
  #allocation0 [shape = 'u32[]', space=smem, size = 0x4, offset = 0x4, fixed_abs, tag = 'smem constant byte address 0x4 - core index']
  #allocation1 [shape = 'u32[144,128]{1,0:T(1,128)}', space=vmem, size = 0x12000, scoped, tag = 'internal scratch']
  #allocation2 [shape = 'f32[4,8,1]{2,1,0:T(8,128)}', space=vmem, size = 0x4000, scoped, tag = 'scratch operand']
  #allocation3 [shape = 'f32[4,8,1]{2,1,0:T(8,128)}', space=vmem, size = 0x4000, scoped, tag = 'scratch operand']
  #allocation4 [shape = 'f32[4,8,8]{2,1,0:T(8,128)}', space=vmem, size = 0x4000, scoped, tag = 'scratch operand']
  %s0 = inlined_call_operand.vmem [shape: f32[2,8,96], index: 0, kind: input, shape index: {}, may-alias: {0,1}]
  %s1 = inlined_call_operand.vmem [shape: f32[2,8,96], index: 1, kind: input, shape index: {}, may-alias: {0,1}]
  %s2 = inlined_call_operand.vmem [shape: f32[2,8,32], index: 2, kind: output, shape index: {}]
  %s3 = sld [smem:[#allocation0]]
  $region53: #{causal_self_attention.4} parent=0
    _
  %s5 = ssub.s32 1, %s3
  %s6 = scalar_select 0, %s5, %s3
  loop: start=0, step=1, limit=4
  $region2: #{causal_self_attention.4} parent=0 // loop_pre_header
    _
  $region3: #{causal_self_attention.4} parent=0 // loop_header
    %s8 = sphi 0, %s12
    %p9 = scmp.ge.s32.totalorder %s8, 4
    %s15 = sphi 0, %s34
    %s16 = sphi 0, %s30
    %s17 = sphi 0, %s26
    %s18 = sphi 0, %s15
    %s19 = sphi 0, %s16
    %s20 = sphi 0, %s17
    %s21 = sphi 0, %s18
    %s22 = sphi 0, %s19
    %s23 = sphi 0, %s20
    %s39 = sphi 0, %s41
    %s42 = sphi 0, %s39
    %s43 = sphi 0, %s42
    %s59 = sphi 0, %s43
    %s67 = sphi 0, %s69
    %s70 = sphi 0, %s67
    %s71 = sphi 0, %s70
    %s87 = sphi 0, %s71
    %s95 = sphi 0, %s97
    %s98 = sphi 0, %s95
    %s99 = sphi 0, %s98
    %s115 = sphi 0, %s99
  $region4: #{causal_self_attention.4} parent=0 // loop_header_branch
    %11 = sbr.rel (%p9) target = $region8
  $region5: #{causal_self_attention.4} parent=0 // loop_body
    %s13 = ssub.s32 %s8, 1
    %s14 = ssub.s32 %s8, 2
    %s24 = sadd.s32 1, %s17
    %p25 = scmp.ge.s32.totalorder %s24, 1
    %s26 = scalar_select %p25, 0, %s24
    %s27 = sadd.s32 1, %s16
    %s28 = scalar_select %p25, %s27, %s16
    %p29 = scmp.ge.s32.totalorder %s28, 1
    %s30 = scalar_select %p29, 0, %s28
    %s31 = sadd.s32 1, %s15
    %s32 = scalar_select %p29, %s31, %s15
    %p33 = scmp.ge.s32.totalorder %s32, 2
    %s34 = scalar_select %p33, 0, %s32
    %s35 = ssub.s32 %s15, %s34
    %s36 = ssub.s32 %s16, %s30
    %s37 = sor.u32 %s35, %s36
    %p38 = scmp.eq.s32.totalorder %s37, 0
    %s40 = sadd.s32 %s39, 1
    %s41 = scalar_select %p38, %s39, %s40
    %p44 = pneg %p38
    %p45 = scmp.eq.s32.totalorder %s8, 1
    %p46 = por %p44, %p45
    %p47 = scmp.ne.s32.totalorder %s39, %s42
    %p48 = scmp.eq.s32.totalorder %s8, 0
    %p49 = por %p47, %p48
    %p50 = scmp.ne.s32.totalorder %s39, %s42
    %p51 = scmp.eq.s32.totalorder %s13, 1
    %p52 = por %p50, %p51
    %p53 = scmp.ne.s32.totalorder %s42, %s43
    %p54 = scmp.eq.s32.totalorder %s13, 0
    %p55 = por %p53, %p54
    %p56 = scmp.ne.s32.totalorder %s42, %s43
    %p57 = scmp.eq.s32.totalorder %s14, 1
    %p58 = por %p56, %p57
    %p60 = scmp.ne.s32.totalorder %s43, %s59
    %p61 = scmp.eq.s32.totalorder %s14, 0
    %p62 = por %p60, %p61
    %s63 = ssub.s32 %s15, %s34
    %s64 = ssub.s32 %s17, %s26
    %s65 = sor.u32 %s63, %s64
    %p66 = scmp.eq.s32.totalorder %s65, 0
    %s68 = sadd.s32 %s67, 1
    %s69 = scalar_select %p66, %s67, %s68
    %p72 = pneg %p66
    %p73 = scmp.eq.s32.totalorder %s8, 1
    %p74 = por %p72, %p73
    %p75 = scmp.ne.s32.totalorder %s67, %s70
    %p76 = scmp.eq.s32.totalorder %s8, 0
    %p77 = por %p75, %p76
    %p78 = scmp.ne.s32.totalorder %s67, %s70
    %p79 = scmp.eq.s32.totalorder %s13, 1
    %p80 = por %p78, %p79
    %p81 = scmp.ne.s32.totalorder %s70, %s71
    %p82 = scmp.eq.s32.totalorder %s13, 0
    %p83 = por %p81, %p82
    %p84 = scmp.ne.s32.totalorder %s70, %s71
    %p85 = scmp.eq.s32.totalorder %s14, 1
    %p86 = por %p84, %p85
    %p88 = scmp.ne.s32.totalorder %s71, %s87
    %p89 = scmp.eq.s32.totalorder %s14, 0
    %p90 = por %p88, %p89
    %s91 = ssub.s32 %s15, %s34
    %s92 = ssub.s32 %s16, %s30
    %s93 = sor.u32 %s91, %s92
    %p94 = scmp.eq.s32.totalorder %s93, 0
    %s96 = sadd.s32 %s95, 1
    %s97 = scalar_select %p94, %s95, %s96
    %p100 = pneg %p94
    %p101 = scmp.eq.s32.totalorder %s8, 1
    %p102 = por %p100, %p101
    %p103 = scmp.ne.s32.totalorder %s95, %s98
    %p104 = scmp.eq.s32.totalorder %s8, 0
    %p105 = por %p103, %p104
    %p106 = scmp.ne.s32.totalorder %s95, %s98
    %p107 = scmp.eq.s32.totalorder %s13, 1
    %p108 = por %p106, %p107
    %p109 = scmp.ne.s32.totalorder %s98, %s99
    %p110 = scmp.eq.s32.totalorder %s13, 0
    %p111 = por %p109, %p110
    %p112 = scmp.ne.s32.totalorder %s98, %s99
    %p113 = scmp.eq.s32.totalorder %s14, 1
    %p114 = por %p112, %p113
    %p116 = scmp.ne.s32.totalorder %s99, %s115
    %p117 = scmp.eq.s32.totalorder %s14, 0
    %p118 = por %p116, %p117
    %p119 = scmp.le.s32.totalorder 1, %s8
    %p120 = scmp.lt.s32.totalorder %s8, 3
    %p121 = pnand %p119, %p120
    %p122 = pneg %p121
    // Predicated region
    $region9: #{causal_self_attention.4} parent=5 // pred_check
      _
    $region10: #{causal_self_attention.4} parent=5 // pred_check_branch
      %124 = sbr.rel (%p121) target = $region12
    $region11: #{causal_self_attention.4} parent=5 // pred_region
      %s125 = ssub.s32 %s8, 1
    $region12: #{causal_self_attention.4} parent=5 // pred_fallthru
      _
    %p126 = scmp.lt.s32.totalorder %s8, 2
    // Predicated region
    $region13: #{causal_self_attention.4} parent=5 // pred_check
      %p127 = pneg %p126
    $region14: #{causal_self_attention.4} parent=5 // pred_check_branch
      %129 = sbr.rel (%p127) target = $region16
    $region15: #{causal_self_attention.4} parent=5 // pred_region
      // Predicated region
      $region17: #{causal_self_attention.4} parent=15 // pred_check
        %p130 = pneg %p49
      $region18: #{causal_self_attention.4} parent=15 // pred_check_branch
        %132 = sbr.rel (%p130) target = $region20
      $region19: #{causal_self_attention.4} parent=15 // pred_region
        %p133 = scmp.lt.s32.totalorder %s15, 1
        %s134 = scalar_select %p133, %s15, 1
        %p135 = scmp.lt.s32.totalorder %s16, 0
        %s136 = scalar_select %p135, %s16, 0
        %s137 = sadd.s32 %s136, %s134
        %s138 = smul.addr %s137, 8
        %s139 = scalar_lea.vmem %s0, %s138
      $region20: #{causal_self_attention.4} parent=15 // pred_fallthru
        _
      // Predicated region
      $region21: #{causal_self_attention.4} parent=15 // pred_check
        %p140 = pneg %p77
      $region22: #{causal_self_attention.4} parent=15 // pred_check_branch
        %142 = sbr.rel (%p140) target = $region24
      $region23: #{causal_self_attention.4} parent=15 // pred_region
        %p143 = scmp.lt.s32.totalorder %s15, 1
        %s144 = scalar_select %p143, %s15, 1
        %p145 = scmp.lt.s32.totalorder %s17, 0
        %s146 = scalar_select %p145, %s17, 0
        %s147 = sadd.s32 %s146, %s144
        %s148 = smul.addr %s147, 8
        %s149 = scalar_lea.vmem %s1, %s148
      $region24: #{causal_self_attention.4} parent=15 // pred_fallthru
        _
    $region16: #{causal_self_attention.4} parent=5 // pred_fallthru
      _
    %p150 = scmp.le.s32.totalorder 1, %s8
    %p151 = scmp.lt.s32.totalorder %s8, 3
    %p152 = pnand %p150, %p151
    %p153 = pneg %p152
    // Predicated region
    $region25: #{causal_self_attention.4} parent=5 // pred_check
      _
    $region26: #{causal_self_attention.4} parent=5 // pred_check_branch
      %155 = sbr.rel (%p152) target = $region28
    $region27: #{causal_self_attention.4} parent=5 // pred_region
      %s156 = ssub.s32 %s8, 1
      %p157 = scmp.lt.s32.totalorder %s18, 1
      %s158 = scalar_select %p157, %s18, 1
      %p159 = scmp.lt.s32.totalorder %s19, 0
      %s160 = scalar_select %p159, %s19, 0
      %s161 = sadd.s32 %s160, %s158
      %s162 = smul.addr %s161, 8
      %s163 = scalar_lea.vmem %s0, %s162
      %p164 = pneg %p55
      %p165 = pneg %p52
      %p166 = scmp.lt.s32.totalorder %s18, 1
      %s167 = scalar_select %p166, %s18, 1
      %p168 = scmp.lt.s32.totalorder %s20, 0
      %s169 = scalar_select %p168, %s20, 0
      %s170 = sadd.s32 %s169, %s167
      %s171 = smul.addr %s170, 8
      %s172 = scalar_lea.vmem %s1, %s171
      %p173 = pneg %p83
      %p174 = pneg %p80
      %p175 = pneg %p111
      %p176 = pneg %p108
      %p177 = scmp.lt.s32.totalorder %s18, 1
      %s178 = scalar_select %p177, %s18, 1
      %p179 = scmp.lt.s32.totalorder %s19, 0
      %s180 = scalar_select %p179, %s19, 0
      %s181 = sadd.s32 %s180, %s178
      %s182 = smul.addr %s181, 8
      %s183 = scalar_lea.vmem %s2, %s182
      %p184 = scmp.lt.s32.totalorder %s18, 1
      %s185 = scalar_select %p184, %s18, 1
      %p186 = scmp.lt.s32.totalorder %s19, 0
      %s187 = scalar_select %p186, %s19, 0
      %s188 = sadd.s32 %s187, %s185
      %s189 = smul.addr %s188, 8
      %s190 = scalar_lea.vmem %s0, %s189
      %p191 = scmp.lt.s32.totalorder %s18, 1
      %s192 = scalar_select %p191, %s18, 1
      %p193 = scmp.lt.s32.totalorder %s20, 0
      %s194 = scalar_select %p193, %s20, 0
      %s195 = sadd.s32 %s194, %s192
      %s196 = smul.addr %s195, 8
      %s197 = scalar_lea.vmem %s1, %s196
      %p198 = scmp.lt.s32.totalorder %s18, 1
      %s199 = scalar_select %p198, %s18, 1
      %p200 = scmp.lt.s32.totalorder %s19, 0
      %s201 = scalar_select %p200, %s19, 0
      %s202 = sadd.s32 %s201, %s199
      %s203 = smul.addr %s202, 8
      %s204 = scalar_lea.vmem %s2, %s203
      %p205 = scmp.eq.s32.totalorder %s20, 0
      // Predicated region
      $region29: #{causal_self_attention.4} parent=27 // pred_check
        %p206 = pneg %p205
      $region30: #{causal_self_attention.4} parent=27 // pred_check_branch
        %208 = sbr.rel (%p206) target = $region32
      $region31: #{causal_self_attention.4} parent=27 // pred_region
        %vm209 = vcmask 7168
        %210 = vst.msk [vmem:[#allocation2] sm:$0xff] %vm209, -1e+30
        %211 = vst.msk [vmem:[#allocation2 + $0x8] sm:$0xff] %vm209, -1e+30
        %212 = vst.msk [vmem:[#allocation2 + $0x10] sm:$0xff] %vm209, -1e+30
        %213 = vst.msk [vmem:[#allocation2 + $0x18] sm:$0xff] %vm209, -1e+30
        %214 = vst.msk [vmem:[#allocation3] sm:$0xff] %vm209, 0.0
        %215 = vst.msk [vmem:[#allocation3 + $0x8] sm:$0xff] %vm209, 0.0
        %216 = vst.msk [vmem:[#allocation3 + $0x10] sm:$0xff] %vm209, 0.0
        %217 = vst.msk [vmem:[#allocation3 + $0x18] sm:$0xff] %vm209, 0.0
        %vm218 = vcmask 64512
        %219 = vst.msk [vmem:[#allocation4] sm:$0xff] %vm218, 0.0
        %220 = vst.msk [vmem:[#allocation4 + $0x8] sm:$0xff] %vm218, 0.0
        %221 = vst.msk [vmem:[#allocation4 + $0x10] sm:$0xff] %vm218, 0.0
        %222 = vst.msk [vmem:[#allocation4 + $0x18] sm:$0xff] %vm218, 0.0
      $region32: #{causal_self_attention.4} parent=27 // pred_fallthru
        _
      %s223 = smul.u32 %s20, 8
      %s224 = sadd.s32 %s19, 1
      %s225 = smul.u32 %s224, 8
      %p226 = scmp.lt.s32.totalorder %s223, %s225
      // Predicated region
      $region33: #{causal_self_attention.4} parent=27 // pred_check
        %p227 = pneg %p226
      $region34: #{causal_self_attention.4} parent=27 // pred_check_branch
        %229 = sbr.rel (%p227) target = $region36
      $region35: #{causal_self_attention.4} parent=27 // pred_region
        %v230 = vld [vmem:[%s190] sm:$0xff]
        %v231 = vld [vmem:[%s197] sm:$0xff]
        %s232 = smul.u32 %s19, 8
        %v233 = vlaneseq
        %v234 = vshrl.u32 %v233, 7
        %v235 = vstv %s232
        %v236 = vadd.s32 %v235, %v234
        %v237 = vlaneseq
        %v238 = vand.u32 %v237, 127
        %v239 = vstv %s223
        %v240 = vadd.s32 %v239, %v238
        %vm241 = vcmp.le.s32.totalorder %v240, %v236
        %v242 = vmul.f32 %v230, 0.35355338
        %244 = vrot.lane.b32.xlu0 %v231, 96
        %v245 = vpop.permute.xlu0 %244
        %vm246 = vcmask 64512
        %v248 = vsel %vm246, %v242, 0
        %v250 = vsel %vm246, %v245, 0
        %252 = vmatprep.subr.mxu0 0.0
        %253 = vmatpush1.xpose.msra.mxu0 %v250
        %254 = vmatprep.subr.mxu0 0.0
        %255 = vmatpush1.xpose.msra.mxu0 0.0
        %256 = vmatprep.subr.mxu0 0.0
        %257 = vmatpush1.xpose.msra.mxu0 0.0
        %258 = vmatprep.subr.mxu0 0.0
        %259 = vmatpush1.xpose.msra.mxu0 0.0
        %260 = vmatprep.subr.mxu0 0.0
        %261 = vmatpush1.xpose.msra.mxu0 0.0
        %262 = vmatprep.subr.mxu0 0.0
        %263 = vmatpush1.xpose.msra.mxu0 0.0
        %264 = vmatprep.subr.mxu0 0.0
        %265 = vmatpush1.xpose.msra.mxu0 0.0
        %266 = vmatprep.subr.mxu0 0.0
        %267 = vmatpush1.xpose.msra.mxu0 0.0
        %268 = vmatprep.subr.mxu0 0.0
        %269 = vmatpush1.xpose.msra.mxu0 0.0
        %270 = vmatprep.subr.mxu0 0.0
        %271 = vmatpush1.xpose.msra.mxu0 0.0
        %272 = vmatprep.subr.mxu0 0.0
        %273 = vmatpush1.xpose.msra.mxu0 0.0
        %274 = vmatprep.subr.mxu0 0.0
        %275 = vmatpush1.xpose.msra.mxu0 0.0
        %276 = vmatprep.subr.mxu0 0.0
        %277 = vmatpush1.xpose.msra.mxu0 0.0
        %278 = vmatprep.subr.mxu0 0.0
        %279 = vmatpush1.xpose.msra.mxu0 0.0
        %280 = vmatprep.subr.mxu0 0.0
        %281 = vmatpush1.xpose.msra.mxu0 0.0
        %282 = vmatprep.subr.mxu0 0.0
        %283 = vmatpush1.xpose.msra.mxu0 0.0
        %284 = vmatprep.subr.mxu0 0.0
        %285 = vmatpush1.xpose.msra.mxu0 0.0
        %286 = vmatprep.subr.mxu0 0.0
        %287 = vmatpush1.xpose.msra.mxu0 0.0
        %288 = vmatprep.subr.mxu0 0.0
        %289 = vmatpush1.xpose.msra.mxu0 0.0
        %290 = vmatprep.subr.mxu0 0.0
        %291 = vmatpush1.xpose.msra.mxu0 0.0
        %292 = vmatprep.subr.mxu0 0.0
        %293 = vmatpush1.xpose.msra.mxu0 0.0
        %294 = vmatprep.subr.mxu0 0.0
        %295 = vmatpush1.xpose.msra.mxu0 0.0
        %296 = vmatprep.subr.mxu0 0.0
        %297 = vmatpush1.xpose.msra.mxu0 0.0
        %298 = vmatprep.subr.mxu0 0.0
        %299 = vmatpush1.xpose.msra.mxu0 0.0
        %300 = vmatprep.subr.mxu0 0.0
        %301 = vmatpush1.xpose.msra.mxu0 0.0
        %302 = vmatprep.subr.mxu0 0.0
        %303 = vmatpush1.xpose.msra.mxu0 0.0
        %304 = vmatprep.subr.mxu0 0.0
        %305 = vmatpush1.xpose.msra.mxu0 0.0
        %306 = vmatprep.subr.mxu0 0.0
        %307 = vmatpush1.xpose.msra.mxu0 0.0
        %308 = vmatprep.subr.mxu0 0.0
        %309 = vmatpush1.xpose.msra.mxu0 0.0
        %310 = vmatprep.subr.mxu0 0.0
        %311 = vmatpush1.xpose.msra.mxu0 0.0
        %312 = vmatprep.subr.mxu0 0.0
        %313 = vmatpush1.xpose.msra.mxu0 0.0
        %314 = vmatprep.subr.mxu0 0.0
        %315 = vmatpush1.xpose.msra.mxu0 0.0
        %316 = vmatprep.mubr.f32.mxu0 0.0
        %317 = vmatmul.mubr.f32.gmra.mrb[0].mxu0 %v248
        %v318 = vpop.f32.mrb[0].mxu0
        %v319 = vadd.f32 0.0, %v318
        %v320 = vpop.f32.mrb[0].mxu0
        %321 = vdwg.mxu0
        %v322 = vsel %vm241, %v319, -1e+30
        %v323 = vld [vmem:[#allocation2] sm:$0xff]
        %v324 = vsel %vm246, %v322, -inf
        %325 = vmax.xlane.f32.xlu0 %v324
        %v326 = vpop.xlane.xlu0 %325
        %v327 = vmax.f32 %v323, %v326
        %v328 = vsub.f32 %v323, %v327
        %v329 = vmul.f32 %v328, 1.442695
        %v330 = vpow.pop %v329
        %332 = vset.pattern.permute.xlu0 0
        %333 = vperm.xlu0 %332, %v327
        %v334 = vpop.permute.xlu0 %333
        %v336 = vsub.f32 %v322, %v334
        %v337 = vmul.f32 %v336, 1.442695
        %v338 = vpow.pop %v337
        %v339 = vld [vmem:[#allocation3] sm:$0xff]
        %v340 = vmul.f32 %v330, %v339
        %v341 = vsel %vm246, %v338, 0.0
        %342 = vadd.xlane.f32.xlu0 %v341
        %v343 = vpop.xlane.xlu0 %342
        %v344 = vadd.f32 %v340, %v343
        %vm345 = vcmask 7168
        %346 = vst.msk [vmem:[#allocation3] sm:$0xff] %vm345, %v344
        %v347 = vld [vmem:[#allocation4] sm:$0xff]
        %349 = vset.pattern.permute.xlu0 0
        %350 = vperm.xlu0 %349, %v330
        %v351 = vpop.permute.xlu0 %350
        %v353 = vmul.f32 %v351, %v347
        %354 = vrot.lane.b32.xlu0 %v231, 64
        %v355 = vpop.permute.xlu0 %354
        %v358 = vsel %vm246, %v338, 0
        %360 = vmatprep.subr.mxu0 0.0
        %361 = vmatpush1.msra.mxu0 %v355
        %362 = vmatprep.subr.mxu0 0.0
        %363 = vmatpush1.msra.mxu0 0.0
        %364 = vmatprep.subr.mxu0 0.0
        %365 = vmatpush1.msra.mxu0 0.0
        %366 = vmatprep.subr.mxu0 0.0
        %367 = vmatpush1.msra.mxu0 0.0
        %368 = vmatprep.subr.mxu0 0.0
        %369 = vmatpush1.msra.mxu0 0.0
        %370 = vmatprep.subr.mxu0 0.0
        %371 = vmatpush1.msra.mxu0 0.0
        %372 = vmatprep.subr.mxu0 0.0
        %373 = vmatpush1.msra.mxu0 0.0
        %374 = vmatprep.subr.mxu0 0.0
        %375 = vmatpush1.msra.mxu0 0.0
        %376 = vmatprep.subr.mxu0 0.0
        %377 = vmatpush1.msra.mxu0 0.0
        %378 = vmatprep.subr.mxu0 0.0
        %379 = vmatpush1.msra.mxu0 0.0
        %380 = vmatprep.subr.mxu0 0.0
        %381 = vmatpush1.msra.mxu0 0.0
        %382 = vmatprep.subr.mxu0 0.0
        %383 = vmatpush1.msra.mxu0 0.0
        %384 = vmatprep.subr.mxu0 0.0
        %385 = vmatpush1.msra.mxu0 0.0
        %386 = vmatprep.subr.mxu0 0.0
        %387 = vmatpush1.msra.mxu0 0.0
        %388 = vmatprep.subr.mxu0 0.0
        %389 = vmatpush1.msra.mxu0 0.0
        %390 = vmatprep.subr.mxu0 0.0
        %391 = vmatpush1.msra.mxu0 0.0
        %392 = vmatprep.subr.mxu0 0.0
        %393 = vmatpush1.msra.mxu0 0.0
        %394 = vmatprep.subr.mxu0 0.0
        %395 = vmatpush1.msra.mxu0 0.0
        %396 = vmatprep.subr.mxu0 0.0
        %397 = vmatpush1.msra.mxu0 0.0
        %398 = vmatprep.subr.mxu0 0.0
        %399 = vmatpush1.msra.mxu0 0.0
        %400 = vmatprep.subr.mxu0 0.0
        %401 = vmatpush1.msra.mxu0 0.0
        %402 = vmatprep.subr.mxu0 0.0
        %403 = vmatpush1.msra.mxu0 0.0
        %404 = vmatprep.subr.mxu0 0.0
        %405 = vmatpush1.msra.mxu0 0.0
        %406 = vmatprep.subr.mxu0 0.0
        %407 = vmatpush1.msra.mxu0 0.0
        %408 = vmatprep.subr.mxu0 0.0
        %409 = vmatpush1.msra.mxu0 0.0
        %410 = vmatprep.subr.mxu0 0.0
        %411 = vmatpush1.msra.mxu0 0.0
        %412 = vmatprep.subr.mxu0 0.0
        %413 = vmatpush1.msra.mxu0 0.0
        %414 = vmatprep.subr.mxu0 0.0
        %415 = vmatpush1.msra.mxu0 0.0
        %416 = vmatprep.subr.mxu0 0.0
        %417 = vmatpush1.msra.mxu0 0.0
        %418 = vmatprep.subr.mxu0 0.0
        %419 = vmatpush1.msra.mxu0 0.0
        %420 = vmatprep.subr.mxu0 0.0
        %421 = vmatpush1.msra.mxu0 0.0
        %422 = vmatprep.subr.mxu0 0.0
        %423 = vmatpush1.msra.mxu0 0.0
        %424 = vmatprep.mubr.f32.mxu0 0.0
        %425 = vmatmul.mubr.f32.gmra.mrb[0].mxu0 %v358
        %v426 = vpop.f32.mrb[0].mxu0
        %v427 = vadd.f32 0.0, %v426
        %v428 = vpop.f32.mrb[0].mxu0
        %429 = vdwg.mxu0
        %v430 = vadd.f32 %v353, %v427
        %431 = vst.msk [vmem:[#allocation4] sm:$0xff] %vm246, %v430
        %432 = vst.msk [vmem:[#allocation2] sm:$0xff] %vm345, %v327
        %433 = vrot.lane.b32.xlu0 %v242, 120
        %v434 = vpop.permute.xlu0 %433
        %435 = vrot.lane.b32.xlu0 %v231, 88
        %v436 = vpop.permute.xlu0 %435
        %v437 = vsel %vm246, %v434, 0
        %v439 = vsel %vm246, %v436, 0
        %441 = vmatprep.subr.mxu0 0.0
        %442 = vmatpush1.xpose.msra.mxu0 %v439
        %443 = vmatprep.subr.mxu0 0.0
        %444 = vmatpush1.xpose.msra.mxu0 0.0
        %445 = vmatprep.subr.mxu0 0.0
        %446 = vmatpush1.xpose.msra.mxu0 0.0
        %447 = vmatprep.subr.mxu0 0.0
        %448 = vmatpush1.xpose.msra.mxu0 0.0
        %449 = vmatprep.subr.mxu0 0.0
        %450 = vmatpush1.xpose.msra.mxu0 0.0
        %451 = vmatprep.subr.mxu0 0.0
        %452 = vmatpush1.xpose.msra.mxu0 0.0
        %453 = vmatprep.subr.mxu0 0.0
        %454 = vmatpush1.xpose.msra.mxu0 0.0
        %455 = vmatprep.subr.mxu0 0.0
        %456 = vmatpush1.xpose.msra.mxu0 0.0
        %457 = vmatprep.subr.mxu0 0.0
        %458 = vmatpush1.xpose.msra.mxu0 0.0
        %459 = vmatprep.subr.mxu0 0.0
        %460 = vmatpush1.xpose.msra.mxu0 0.0
        %461 = vmatprep.subr.mxu0 0.0
        %462 = vmatpush1.xpose.msra.mxu0 0.0
        %463 = vmatprep.subr.mxu0 0.0
        %464 = vmatpush1.xpose.msra.mxu0 0.0
        %465 = vmatprep.subr.mxu0 0.0
        %466 = vmatpush1.xpose.msra.mxu0 0.0
        %467 = vmatprep.subr.mxu0 0.0
        %468 = vmatpush1.xpose.msra.mxu0 0.0
        %469 = vmatprep.subr.mxu0 0.0
        %470 = vmatpush1.xpose.msra.mxu0 0.0
        %471 = vmatprep.subr.mxu0 0.0
        %472 = vmatpush1.xpose.msra.mxu0 0.0
        %473 = vmatprep.subr.mxu0 0.0
        %474 = vmatpush1.xpose.msra.mxu0 0.0
        %475 = vmatprep.subr.mxu0 0.0
        %476 = vmatpush1.xpose.msra.mxu0 0.0
        %477 = vmatprep.subr.mxu0 0.0
        %478 = vmatpush1.xpose.msra.mxu0 0.0
        %479 = vmatprep.subr.mxu0 0.0
        %480 = vmatpush1.xpose.msra.mxu0 0.0
        %481 = vmatprep.subr.mxu0 0.0
        %482 = vmatpush1.xpose.msra.mxu0 0.0
        %483 = vmatprep.subr.mxu0 0.0
        %484 = vmatpush1.xpose.msra.mxu0 0.0
        %485 = vmatprep.subr.mxu0 0.0
        %486 = vmatpush1.xpose.msra.mxu0 0.0
        %487 = vmatprep.subr.mxu0 0.0
        %488 = vmatpush1.xpose.msra.mxu0 0.0
        %489 = vmatprep.subr.mxu0 0.0
        %490 = vmatpush1.xpose.msra.mxu0 0.0
        %491 = vmatprep.subr.mxu0 0.0
        %492 = vmatpush1.xpose.msra.mxu0 0.0
        %493 = vmatprep.subr.mxu0 0.0
        %494 = vmatpush1.xpose.msra.mxu0 0.0
        %495 = vmatprep.subr.mxu0 0.0
        %496 = vmatpush1.xpose.msra.mxu0 0.0
        %497 = vmatprep.subr.mxu0 0.0
        %498 = vmatpush1.xpose.msra.mxu0 0.0
        %499 = vmatprep.subr.mxu0 0.0
        %500 = vmatpush1.xpose.msra.mxu0 0.0
        %501 = vmatprep.subr.mxu0 0.0
        %502 = vmatpush1.xpose.msra.mxu0 0.0
        %503 = vmatprep.subr.mxu0 0.0
        %504 = vmatpush1.xpose.msra.mxu0 0.0
        %505 = vmatprep.mubr.f32.mxu0 0.0
        %506 = vmatmul.mubr.f32.gmra.mrb[0].mxu0 %v437
        %v507 = vpop.f32.mrb[0].mxu0
        %v508 = vadd.f32 0.0, %v507
        %v509 = vpop.f32.mrb[0].mxu0
        %510 = vdwg.mxu0
        %v511 = vsel %vm241, %v508, -1e+30
        %s512 = scalar_lea.vmem [#allocation2], 8
        %v513 = vld [vmem:[%s512] sm:$0xff]
        %v514 = vsel %vm246, %v511, -inf
        %515 = vmax.xlane.f32.xlu0 %v514
        %v516 = vpop.xlane.xlu0 %515
        %v517 = vmax.f32 %v513, %v516
        %v518 = vsub.f32 %v513, %v517
        %v519 = vmul.f32 %v518, 1.442695
        %v520 = vpow.pop %v519
        %522 = vset.pattern.permute.xlu0 0
        %523 = vperm.xlu0 %522, %v517
        %v524 = vpop.permute.xlu0 %523
        %v526 = vsub.f32 %v511, %v524
        %v527 = vmul.f32 %v526, 1.442695
        %v528 = vpow.pop %v527
        %s529 = scalar_lea.vmem [#allocation3], 8
        %v530 = vld [vmem:[%s529] sm:$0xff]
        %v531 = vmul.f32 %v520, %v530
        %v532 = vsel %vm246, %v528, 0.0
        %533 = vadd.xlane.f32.xlu0 %v532
        %v534 = vpop.xlane.xlu0 %533
        %v535 = vadd.f32 %v531, %v534
        %536 = vst.msk [vmem:[%s529] sm:$0xff] %vm345, %v535
        %s537 = scalar_lea.vmem [#allocation4], 8
        %v538 = vld [vmem:[%s537] sm:$0xff]
        %540 = vset.pattern.permute.xlu0 0
        %541 = vperm.xlu0 %540, %v520
        %v542 = vpop.permute.xlu0 %541
        %v544 = vmul.f32 %v542, %v538
        %545 = vrot.lane.b32.xlu0 %v231, 56
        %v546 = vpop.permute.xlu0 %545
        %v549 = vsel %vm246, %v528, 0
        %551 = vmatprep.subr.mxu0 0.0
        %552 = vmatpush1.msra.mxu0 %v546
        %553 = vmatprep.subr.mxu0 0.0
        %554 = vmatpush1.msra.mxu0 0.0
        %555 = vmatprep.subr.mxu0 0.0
        %556 = vmatpush1.msra.mxu0 0.0
        %557 = vmatprep.subr.mxu0 0.0
        %558 = vmatpush1.msra.mxu0 0.0
        %559 = vmatprep.subr.mxu0 0.0
        %560 = vmatpush1.msra.mxu0 0.0
        %561 = vmatprep.subr.mxu0 0.0
        %562 = vmatpush1.msra.mxu0 0.0
        %563 = vmatprep.subr.mxu0 0.0
        %564 = vmatpush1.msra.mxu0 0.0
        %565 = vmatprep.subr.mxu0 0.0
        %566 = vmatpush1.msra.mxu0 0.0
        %567 = vmatprep.subr.mxu0 0.0
        %568 = vmatpush1.msra.mxu0 0.0
        %569 = vmatprep.subr.mxu0 0.0
        %570 = vmatpush1.msra.mxu0 0.0
        %571 = vmatprep.subr.mxu0 0.0
        %572 = vmatpush1.msra.mxu0 0.0
        %573 = vmatprep.subr.mxu0 0.0
        %574 = vmatpush1.msra.mxu0 0.0
        %575 = vmatprep.subr.mxu0 0.0
        %576 = vmatpush1.msra.mxu0 0.0
        %577 = vmatprep.subr.mxu0 0.0
        %578 = vmatpush1.msra.mxu0 0.0
        %579 = vmatprep.subr.mxu0 0.0
        %580 = vmatpush1.msra.mxu0 0.0
        %581 = vmatprep.subr.mxu0 0.0
        %582 = vmatpush1.msra.mxu0 0.0
        %583 = vmatprep.subr.mxu0 0.0
        %584 = vmatpush1.msra.mxu0 0.0
        %585 = vmatprep.subr.mxu0 0.0
        %586 = vmatpush1.msra.mxu0 0.0
        %587 = vmatprep.subr.mxu0 0.0
        %588 = vmatpush1.msra.mxu0 0.0
        %589 = vmatprep.subr.mxu0 0.0
        %590 = vmatpush1.msra.mxu0 0.0
        %591 = vmatprep.subr.mxu0 0.0
        %592 = vmatpush1.msra.mxu0 0.0
        %593 = vmatprep.subr.mxu0 0.0
        %594 = vmatpush1.msra.mxu0 0.0
        %595 = vmatprep.subr.mxu0 0.0
        %596 = vmatpush1.msra.mxu0 0.0
        %597 = vmatprep.subr.mxu0 0.0
        %598 = vmatpush1.msra.mxu0 0.0
        %599 = vmatprep.subr.mxu0 0.0
        %600 = vmatpush1.msra.mxu0 0.0
        %601 = vmatprep.subr.mxu0 0.0
        %602 = vmatpush1.msra.mxu0 0.0
        %603 = vmatprep.subr.mxu0 0.0
        %604 = vmatpush1.msra.mxu0 0.0
        %605 = vmatprep.subr.mxu0 0.0
        %606 = vmatpush1.msra.mxu0 0.0
        %607 = vmatprep.subr.mxu0 0.0
        %608 = vmatpush1.msra.mxu0 0.0
        %609 = vmatprep.subr.mxu0 0.0
        %610 = vmatpush1.msra.mxu0 0.0
        %611 = vmatprep.subr.mxu0 0.0
        %612 = vmatpush1.msra.mxu0 0.0
        %613 = vmatprep.subr.mxu0 0.0
        %614 = vmatpush1.msra.mxu0 0.0
        %615 = vmatprep.mubr.f32.mxu0 0.0
        %616 = vmatmul.mubr.f32.gmra.mrb[0].mxu0 %v549
        %v617 = vpop.f32.mrb[0].mxu0
        %v618 = vadd.f32 0.0, %v617
        %v619 = vpop.f32.mrb[0].mxu0
        %620 = vdwg.mxu0
        %v621 = vadd.f32 %v544, %v618
        %622 = vst.msk [vmem:[%s537] sm:$0xff] %vm246, %v621
        %623 = vst.msk [vmem:[%s512] sm:$0xff] %vm345, %v517
        %624 = vrot.lane.b32.xlu0 %v242, 112
        %v625 = vpop.permute.xlu0 %624
        %626 = vrot.lane.b32.xlu0 %v231, 80
        %v627 = vpop.permute.xlu0 %626
        %v628 = vsel %vm246, %v625, 0
        %v630 = vsel %vm246, %v627, 0
        %632 = vmatprep.subr.mxu0 0.0
        %633 = vmatpush1.xpose.msra.mxu0 %v630
        %634 = vmatprep.subr.mxu0 0.0
        %635 = vmatpush1.xpose.msra.mxu0 0.0
        %636 = vmatprep.subr.mxu0 0.0
        %637 = vmatpush1.xpose.msra.mxu0 0.0
        %638 = vmatprep.subr.mxu0 0.0
        %639 = vmatpush1.xpose.msra.mxu0 0.0
        %640 = vmatprep.subr.mxu0 0.0
        %641 = vmatpush1.xpose.msra.mxu0 0.0
        %642 = vmatprep.subr.mxu0 0.0
        %643 = vmatpush1.xpose.msra.mxu0 0.0
        %644 = vmatprep.subr.mxu0 0.0
        %645 = vmatpush1.xpose.msra.mxu0 0.0
        %646 = vmatprep.subr.mxu0 0.0
        %647 = vmatpush1.xpose.msra.mxu0 0.0
        %648 = vmatprep.subr.mxu0 0.0
        %649 = vmatpush1.xpose.msra.mxu0 0.0
        %650 = vmatprep.subr.mxu0 0.0
        %651 = vmatpush1.xpose.msra.mxu0 0.0
        %652 = vmatprep.subr.mxu0 0.0
        %653 = vmatpush1.xpose.msra.mxu0 0.0
        %654 = vmatprep.subr.mxu0 0.0
        %655 = vmatpush1.xpose.msra.mxu0 0.0
        %656 = vmatprep.subr.mxu0 0.0
        %657 = vmatpush1.xpose.msra.mxu0 0.0
        %658 = vmatprep.subr.mxu0 0.0
        %659 = vmatpush1.xpose.msra.mxu0 0.0
        %660 = vmatprep.subr.mxu0 0.0
        %661 = vmatpush1.xpose.msra.mxu0 0.0
        %662 = vmatprep.subr.mxu0 0.0
        %663 = vmatpush1.xpose.msra.mxu0 0.0
        %664 = vmatprep.subr.mxu0 0.0
        %665 = vmatpush1.xpose.msra.mxu0 0.0
        %666 = vmatprep.subr.mxu0 0.0
        %667 = vmatpush1.xpose.msra.mxu0 0.0
        %668 = vmatprep.subr.mxu0 0.0
        %669 = vmatpush1.xpose.msra.mxu0 0.0
        %670 = vmatprep.subr.mxu0 0.0
        %671 = vmatpush1.xpose.msra.mxu0 0.0
        %672 = vmatprep.subr.mxu0 0.0
        %673 = vmatpush1.xpose.msra.mxu0 0.0
        %674 = vmatprep.subr.mxu0 0.0
        %675 = vmatpush1.xpose.msra.mxu0 0.0
        %676 = vmatprep.subr.mxu0 0.0
        %677 = vmatpush1.xpose.msra.mxu0 0.0
        %678 = vmatprep.subr.mxu0 0.0
        %679 = vmatpush1.xpose.msra.mxu0 0.0
        %680 = vmatprep.subr.mxu0 0.0
        %681 = vmatpush1.xpose.msra.mxu0 0.0
        %682 = vmatprep.subr.mxu0 0.0
        %683 = vmatpush1.xpose.msra.mxu0 0.0
        %684 = vmatprep.subr.mxu0 0.0
        %685 = vmatpush1.xpose.msra.mxu0 0.0
        %686 = vmatprep.subr.mxu0 0.0
        %687 = vmatpush1.xpose.msra.mxu0 0.0
        %688 = vmatprep.subr.mxu0 0.0
        %689 = vmatpush1.xpose.msra.mxu0 0.0
        %690 = vmatprep.subr.mxu0 0.0
        %691 = vmatpush1.xpose.msra.mxu0 0.0
        %692 = vmatprep.subr.mxu0 0.0
        %693 = vmatpush1.xpose.msra.mxu0 0.0
        %694 = vmatprep.subr.mxu0 0.0
        %695 = vmatpush1.xpose.msra.mxu0 0.0
        %696 = vmatprep.mubr.f32.mxu0 0.0
        %697 = vmatmul.mubr.f32.gmra.mrb[0].mxu0 %v628
        %v698 = vpop.f32.mrb[0].mxu0
        %v699 = vadd.f32 0.0, %v698
        %v700 = vpop.f32.mrb[0].mxu0
        %701 = vdwg.mxu0
        %v702 = vsel %vm241, %v699, -1e+30
        %s703 = scalar_lea.vmem [#allocation2], 16
        %v704 = vld [vmem:[%s703] sm:$0xff]
        %v705 = vsel %vm246, %v702, -inf
        %706 = vmax.xlane.f32.xlu0 %v705
        %v707 = vpop.xlane.xlu0 %706
        %v708 = vmax.f32 %v704, %v707
        %v709 = vsub.f32 %v704, %v708
        %v710 = vmul.f32 %v709, 1.442695
        %v711 = vpow.pop %v710
        %713 = vset.pattern.permute.xlu0 0
        %714 = vperm.xlu0 %713, %v708
        %v715 = vpop.permute.xlu0 %714
        %v717 = vsub.f32 %v702, %v715
        %v718 = vmul.f32 %v717, 1.442695
        %v719 = vpow.pop %v718
        %s720 = scalar_lea.vmem [#allocation3], 16
        %v721 = vld [vmem:[%s720] sm:$0xff]
        %v722 = vmul.f32 %v711, %v721
        %v723 = vsel %vm246, %v719, 0.0
        %724 = vadd.xlane.f32.xlu0 %v723
        %v725 = vpop.xlane.xlu0 %724
        %v726 = vadd.f32 %v722, %v725
        %727 = vst.msk [vmem:[%s720] sm:$0xff] %vm345, %v726
        %s728 = scalar_lea.vmem [#allocation4], 16
        %v729 = vld [vmem:[%s728] sm:$0xff]
        %731 = vset.pattern.permute.xlu0 0
        %732 = vperm.xlu0 %731, %v711
        %v733 = vpop.permute.xlu0 %732
        %v735 = vmul.f32 %v733, %v729
        %736 = vrot.lane.b32.xlu0 %v231, 48
        %v737 = vpop.permute.xlu0 %736
        %v740 = vsel %vm246, %v719, 0
        %742 = vmatprep.subr.mxu0 0.0
        %743 = vmatpush1.msra.mxu0 %v737
        %744 = vmatprep.subr.mxu0 0.0
        %745 = vmatpush1.msra.mxu0 0.0
        %746 = vmatprep.subr.mxu0 0.0
        %747 = vmatpush1.msra.mxu0 0.0
        %748 = vmatprep.subr.mxu0 0.0
        %749 = vmatpush1.msra.mxu0 0.0
        %750 = vmatprep.subr.mxu0 0.0
        %751 = vmatpush1.msra.mxu0 0.0
        %752 = vmatprep.subr.mxu0 0.0
        %753 = vmatpush1.msra.mxu0 0.0
        %754 = vmatprep.subr.mxu0 0.0
        %755 = vmatpush1.msra.mxu0 0.0
        %756 = vmatprep.subr.mxu0 0.0
        %757 = vmatpush1.msra.mxu0 0.0
        %758 = vmatprep.subr.mxu0 0.0
        %759 = vmatpush1.msra.mxu0 0.0
        %760 = vmatprep.subr.mxu0 0.0
        %761 = vmatpush1.msra.mxu0 0.0
        %762 = vmatprep.subr.mxu0 0.0
        %763 = vmatpush1.msra.mxu0 0.0
        %764 = vmatprep.subr.mxu0 0.0
        %765 = vmatpush1.msra.mxu0 0.0
        %766 = vmatprep.subr.mxu0 0.0
        %767 = vmatpush1.msra.mxu0 0.0
        %768 = vmatprep.subr.mxu0 0.0
        %769 = vmatpush1.msra.mxu0 0.0
        %770 = vmatprep.subr.mxu0 0.0
        %771 = vmatpush1.msra.mxu0 0.0
        %772 = vmatprep.subr.mxu0 0.0
        %773 = vmatpush1.msra.mxu0 0.0
        %774 = vmatprep.subr.mxu0 0.0
        %775 = vmatpush1.msra.mxu0 0.0
        %776 = vmatprep.subr.mxu0 0.0
        %777 = vmatpush1.msra.mxu0 0.0
        %778 = vmatprep.subr.mxu0 0.0
        %779 = vmatpush1.msra.mxu0 0.0
        %780 = vmatprep.subr.mxu0 0.0
        %781 = vmatpush1.msra.mxu0 0.0
        %782 = vmatprep.subr.mxu0 0.0
        %783 = vmatpush1.msra.mxu0 0.0
        %784 = vmatprep.subr.mxu0 0.0
        %785 = vmatpush1.msra.mxu0 0.0
        %786 = vmatprep.subr.mxu0 0.0
        %787 = vmatpush1.msra.mxu0 0.0
        %788 = vmatprep.subr.mxu0 0.0
        %789 = vmatpush1.msra.mxu0 0.0
        %790 = vmatprep.subr.mxu0 0.0
        %791 = vmatpush1.msra.mxu0 0.0
        %792 = vmatprep.subr.mxu0 0.0
        %793 = vmatpush1.msra.mxu0 0.0
        %794 = vmatprep.subr.mxu0 0.0
        %795 = vmatpush1.msra.mxu0 0.0
        %796 = vmatprep.subr.mxu0 0.0
        %797 = vmatpush1.msra.mxu0 0.0
        %798 = vmatprep.subr.mxu0 0.0
        %799 = vmatpush1.msra.mxu0 0.0
        %800 = vmatprep.subr.mxu0 0.0
        %801 = vmatpush1.msra.mxu0 0.0
        %802 = vmatprep.subr.mxu0 0.0
        %803 = vmatpush1.msra.mxu0 0.0
        %804 = vmatprep.subr.mxu0 0.0
        %805 = vmatpush1.msra.mxu0 0.0
        %806 = vmatprep.mubr.f32.mxu0 0.0
        %807 = vmatmul.mubr.f32.gmra.mrb[0].mxu0 %v740
        %v808 = vpop.f32.mrb[0].mxu0
        %v809 = vadd.f32 0.0, %v808
        %v810 = vpop.f32.mrb[0].mxu0
        %811 = vdwg.mxu0
        %v812 = vadd.f32 %v735, %v809
        %813 = vst.msk [vmem:[%s728] sm:$0xff] %vm246, %v812
        %814 = vst.msk [vmem:[%s703] sm:$0xff] %vm345, %v708
        %815 = vrot.lane.b32.xlu0 %v242, 104
        %v816 = vpop.permute.xlu0 %815
        %817 = vrot.lane.b32.xlu0 %v231, 72
        %v818 = vpop.permute.xlu0 %817
        %v819 = vsel %vm246, %v816, 0
        %v821 = vsel %vm246, %v818, 0
        %823 = vmatprep.subr.mxu0 0.0
        %824 = vmatpush1.xpose.msra.mxu0 %v821
        %825 = vmatprep.subr.mxu0 0.0
        %826 = vmatpush1.xpose.msra.mxu0 0.0
        %827 = vmatprep.subr.mxu0 0.0
        %828 = vmatpush1.xpose.msra.mxu0 0.0
        %829 = vmatprep.subr.mxu0 0.0
        %830 = vmatpush1.xpose.msra.mxu0 0.0
        %831 = vmatprep.subr.mxu0 0.0
        %832 = vmatpush1.xpose.msra.mxu0 0.0
        %833 = vmatprep.subr.mxu0 0.0
        %834 = vmatpush1.xpose.msra.mxu0 0.0
        %835 = vmatprep.subr.mxu0 0.0
        %836 = vmatpush1.xpose.msra.mxu0 0.0
        %837 = vmatprep.subr.mxu0 0.0
        %838 = vmatpush1.xpose.msra.mxu0 0.0
        %839 = vmatprep.subr.mxu0 0.0
        %840 = vmatpush1.xpose.msra.mxu0 0.0
        %841 = vmatprep.subr.mxu0 0.0
        %842 = vmatpush1.xpose.msra.mxu0 0.0
        %843 = vmatprep.subr.mxu0 0.0
        %844 = vmatpush1.xpose.msra.mxu0 0.0
        %845 = vmatprep.subr.mxu0 0.0
        %846 = vmatpush1.xpose.msra.mxu0 0.0
        %847 = vmatprep.subr.mxu0 0.0
        %848 = vmatpush1.xpose.msra.mxu0 0.0
        %849 = vmatprep.subr.mxu0 0.0
        %850 = vmatpush1.xpose.msra.mxu0 0.0
        %851 = vmatprep.subr.mxu0 0.0
        %852 = vmatpush1.xpose.msra.mxu0 0.0
        %853 = vmatprep.subr.mxu0 0.0
        %854 = vmatpush1.xpose.msra.mxu0 0.0
        %855 = vmatprep.subr.mxu0 0.0
        %856 = vmatpush1.xpose.msra.mxu0 0.0
        %857 = vmatprep.subr.mxu0 0.0
        %858 = vmatpush1.xpose.msra.mxu0 0.0
        %859 = vmatprep.subr.mxu0 0.0
        %860 = vmatpush1.xpose.msra.mxu0 0.0
        %861 = vmatprep.subr.mxu0 0.0
        %862 = vmatpush1.xpose.msra.mxu0 0.0
        %863 = vmatprep.subr.mxu0 0.0
        %864 = vmatpush1.xpose.msra.mxu0 0.0
        %865 = vmatprep.subr.mxu0 0.0
        %866 = vmatpush1.xpose.msra.mxu0 0.0
        %867 = vmatprep.subr.mxu0 0.0
        %868 = vmatpush1.xpose.msra.mxu0 0.0
        %869 = vmatprep.subr.mxu0 0.0
        %870 = vmatpush1.xpose.msra.mxu0 0.0
        %871 = vmatprep.subr.mxu0 0.0
        %872 = vmatpush1.xpose.msra.mxu0 0.0
        %873 = vmatprep.subr.mxu0 0.0
        %874 = vmatpush1.xpose.msra.mxu0 0.0
        %875 = vmatprep.subr.mxu0 0.0
        %876 = vmatpush1.xpose.msra.mxu0 0.0
        %877 = vmatprep.subr.mxu0 0.0
        %878 = vmatpush1.xpose.msra.mxu0 0.0
        %879 = vmatprep.subr.mxu0 0.0
        %880 = vmatpush1.xpose.msra.mxu0 0.0
        %881 = vmatprep.subr.mxu0 0.0
        %882 = vmatpush1.xpose.msra.mxu0 0.0
        %883 = vmatprep.subr.mxu0 0.0
        %884 = vmatpush1.xpose.msra.mxu0 0.0
        %885 = vmatprep.subr.mxu0 0.0
        %886 = vmatpush1.xpose.msra.mxu0 0.0
        %887 = vmatprep.mubr.f32.mxu0 0.0
        %888 = vmatmul.mubr.f32.gmra.mrb[0].mxu0 %v819
        %v889 = vpop.f32.mrb[0].mxu0
        %v890 = vadd.f32 0.0, %v889
        %v891 = vpop.f32.mrb[0].mxu0
        %892 = vdwg.mxu0
        %v893 = vsel %vm241, %v890, -1e+30
        %s894 = scalar_lea.vmem [#allocation2], 24
        %v895 = vld [vmem:[%s894] sm:$0xff]
        %v896 = vsel %vm246, %v893, -inf
        %897 = vmax.xlane.f32.xlu0 %v896
        %v898 = vpop.xlane.xlu0 %897
        %v899 = vmax.f32 %v895, %v898
        %v900 = vsub.f32 %v895, %v899
        %v901 = vmul.f32 %v900, 1.442695
        %v902 = vpow.pop %v901
        %904 = vset.pattern.permute.xlu0 0
        %905 = vperm.xlu0 %904, %v899
        %v906 = vpop.permute.xlu0 %905
        %v908 = vsub.f32 %v893, %v906
        %v909 = vmul.f32 %v908, 1.442695
        %v910 = vpow.pop %v909
        %s911 = scalar_lea.vmem [#allocation3], 24
        %v912 = vld [vmem:[%s911] sm:$0xff]
        %v913 = vmul.f32 %v902, %v912
        %v914 = vsel %vm246, %v910, 0.0
        %915 = vadd.xlane.f32.xlu0 %v914
        %v916 = vpop.xlane.xlu0 %915
        %v917 = vadd.f32 %v913, %v916
        %918 = vst.msk [vmem:[%s911] sm:$0xff] %vm345, %v917
        %s919 = scalar_lea.vmem [#allocation4], 24
        %v920 = vld [vmem:[%s919] sm:$0xff]
        %922 = vset.pattern.permute.xlu0 0
        %923 = vperm.xlu0 %922, %v902
        %v924 = vpop.permute.xlu0 %923
        %v926 = vmul.f32 %v924, %v920
        %927 = vrot.lane.b32.xlu0 %v231, 40
        %v928 = vpop.permute.xlu0 %927
        %v931 = vsel %vm246, %v910, 0
        %933 = vmatprep.subr.mxu0 0.0
        %934 = vmatpush1.msra.mxu0 %v928
        %935 = vmatprep.subr.mxu0 0.0
        %936 = vmatpush1.msra.mxu0 0.0
        %937 = vmatprep.subr.mxu0 0.0
        %938 = vmatpush1.msra.mxu0 0.0
        %939 = vmatprep.subr.mxu0 0.0
        %940 = vmatpush1.msra.mxu0 0.0
        %941 = vmatprep.subr.mxu0 0.0
        %942 = vmatpush1.msra.mxu0 0.0
        %943 = vmatprep.subr.mxu0 0.0
        %944 = vmatpush1.msra.mxu0 0.0
        %945 = vmatprep.subr.mxu0 0.0
        %946 = vmatpush1.msra.mxu0 0.0
        %947 = vmatprep.subr.mxu0 0.0
        %948 = vmatpush1.msra.mxu0 0.0
        %949 = vmatprep.subr.mxu0 0.0
        %950 = vmatpush1.msra.mxu0 0.0
        %951 = vmatprep.subr.mxu0 0.0
        %952 = vmatpush1.msra.mxu0 0.0
        %953 = vmatprep.subr.mxu0 0.0
        %954 = vmatpush1.msra.mxu0 0.0
        %955 = vmatprep.subr.mxu0 0.0
        %956 = vmatpush1.msra.mxu0 0.0
        %957 = vmatprep.subr.mxu0 0.0
        %958 = vmatpush1.msra.mxu0 0.0
        %959 = vmatprep.subr.mxu0 0.0
        %960 = vmatpush1.msra.mxu0 0.0
        %961 = vmatprep.subr.mxu0 0.0
        %962 = vmatpush1.msra.mxu0 0.0
        %963 = vmatprep.subr.mxu0 0.0
        %964 = vmatpush1.msra.mxu0 0.0
        %965 = vmatprep.subr.mxu0 0.0
        %966 = vmatpush1.msra.mxu0 0.0
        %967 = vmatprep.subr.mxu0 0.0
        %968 = vmatpush1.msra.mxu0 0.0
        %969 = vmatprep.subr.mxu0 0.0
        %970 = vmatpush1.msra.mxu0 0.0
        %971 = vmatprep.subr.mxu0 0.0
        %972 = vmatpush1.msra.mxu0 0.0
        %973 = vmatprep.subr.mxu0 0.0
        %974 = vmatpush1.msra.mxu0 0.0
        %975 = vmatprep.subr.mxu0 0.0
        %976 = vmatpush1.msra.mxu0 0.0
        %977 = vmatprep.subr.mxu0 0.0
        %978 = vmatpush1.msra.mxu0 0.0
        %979 = vmatprep.subr.mxu0 0.0
        %980 = vmatpush1.msra.mxu0 0.0
        %981 = vmatprep.subr.mxu0 0.0
        %982 = vmatpush1.msra.mxu0 0.0
        %983 = vmatprep.subr.mxu0 0.0
        %984 = vmatpush1.msra.mxu0 0.0
        %985 = vmatprep.subr.mxu0 0.0
        %986 = vmatpush1.msra.mxu0 0.0
        %987 = vmatprep.subr.mxu0 0.0
        %988 = vmatpush1.msra.mxu0 0.0
        %989 = vmatprep.subr.mxu0 0.0
        %990 = vmatpush1.msra.mxu0 0.0
        %991 = vmatprep.subr.mxu0 0.0
        %992 = vmatpush1.msra.mxu0 0.0
        %993 = vmatprep.subr.mxu0 0.0
        %994 = vmatpush1.msra.mxu0 0.0
        %995 = vmatprep.subr.mxu0 0.0
        %996 = vmatpush1.msra.mxu0 0.0
        %997 = vmatprep.mubr.f32.mxu0 0.0
        %998 = vmatmul.mubr.f32.gmra.mrb[0].mxu0 %v931
        %v999 = vpop.f32.mrb[0].mxu0
        %v1000 = vadd.f32 0.0, %v999
        %v1001 = vpop.f32.mrb[0].mxu0
        %1002 = vdwg.mxu0
        %v1003 = vadd.f32 %v926, %v1000
        %1004 = vst.msk [vmem:[%s919] sm:$0xff] %vm246, %v1003
        %1005 = vst.msk [vmem:[%s894] sm:$0xff] %vm345, %v899
      $region36: #{causal_self_attention.4} parent=27 // pred_fallthru
        _
      // Predicated region
      $region37: #{causal_self_attention.4} parent=27 // pred_check
        %p1006 = pneg %p205
      $region38: #{causal_self_attention.4} parent=27 // pred_check_branch
        %1008 = sbr.rel (%p1006) target = $region40
      $region39: #{causal_self_attention.4} parent=27 // pred_region
        %v1009 = vld [vmem:[#allocation3] sm:$0xff]
        %v1010 = vrcp.pop %v1009
        %v1011 = vld [vmem:[#allocation4] sm:$0xff]
        %1013 = vset.pattern.permute.xlu0 0
        %1014 = vperm.xlu0 %1013, %v1010
        %v1015 = vpop.permute.xlu0 %1014
        %v1017 = vmul.f32 %v1011, %v1015
        %s1018 = scalar_lea.vmem [#allocation3], 8
        %v1019 = vld [vmem:[%s1018] sm:$0xff]
        %v1020 = vrcp.pop %v1019
        %s1021 = scalar_lea.vmem [#allocation4], 8
        %v1022 = vld [vmem:[%s1021] sm:$0xff]
        %1024 = vset.pattern.permute.xlu0 0
        %1025 = vperm.xlu0 %1024, %v1020
        %v1026 = vpop.permute.xlu0 %1025
        %v1028 = vmul.f32 %v1022, %v1026
        %s1029 = scalar_lea.vmem [#allocation3], 16
        %v1030 = vld [vmem:[%s1029] sm:$0xff]
        %v1031 = vrcp.pop %v1030
        %s1032 = scalar_lea.vmem [#allocation4], 16
        %v1033 = vld [vmem:[%s1032] sm:$0xff]
        %1035 = vset.pattern.permute.xlu0 0
        %1036 = vperm.xlu0 %1035, %v1031
        %v1037 = vpop.permute.xlu0 %1036
        %v1039 = vmul.f32 %v1033, %v1037
        %s1040 = scalar_lea.vmem [#allocation3], 24
        %v1041 = vld [vmem:[%s1040] sm:$0xff]
        %v1042 = vrcp.pop %v1041
        %s1043 = scalar_lea.vmem [#allocation4], 24
        %v1044 = vld [vmem:[%s1043] sm:$0xff]
        %1046 = vset.pattern.permute.xlu0 0
        %1047 = vperm.xlu0 %1046, %v1042
        %v1048 = vpop.permute.xlu0 %1047
        %v1050 = vmul.f32 %v1044, %v1048
        %1052 = vrot.lane.b32.xlu0 %v1028, 8
        %v1053 = vpop.permute.xlu0 %1052
        %1056 = vrot.lane.b32.xlu0 %v1039, 16
        %v1057 = vpop.permute.xlu0 %1056
        %1060 = vrot.lane.b32.xlu0 %v1050, 24
        %v1061 = vpop.permute.xlu0 %1060
        %vm1063 = vcmask 64512
        %v1064 = vsel %vm1063, %v1017, %v1053
        %vm1065 = vcmask 130048
        %v1066 = vsel %vm1065, %v1064, %v1057
        %vm1067 = vcmask 195584
        %v1068 = vsel %vm1067, %v1066, %v1061
        %vm1069 = vcmask 261120
        %1070 = vst.msk [vmem:[%s204] sm:$0xff] %vm1069, %v1068
      $region40: #{causal_self_attention.4} parent=27 // pred_fallthru
        _
      %p1071 = scmp.lt.s32.totalorder %s18, 1
      %s1072 = scalar_select %p1071, %s18, 1
      %p1073 = scmp.lt.s32.totalorder %s19, 0
      %s1074 = scalar_select %p1073, %s19, 0
      %s1075 = sadd.s32 %s1074, %s1072
      %s1076 = smul.addr %s1075, 8
      %s1077 = scalar_lea.vmem %s2, %s1076
      // Predicated region
      $region41: #{causal_self_attention.4} parent=27 // pred_check
        %p1078 = pneg %p108
      $region42: #{causal_self_attention.4} parent=27 // pred_check_branch
        %1080 = sbr.rel (%p1078) target = $region44
      $region43: #{causal_self_attention.4} parent=27 // pred_region
        _
      $region44: #{causal_self_attention.4} parent=27 // pred_fallthru
        _
    $region28: #{causal_self_attention.4} parent=5 // pred_fallthru
      _
    %p1081 = scmp.le.s32.totalorder 2, %s8
    // Predicated region
    $region45: #{causal_self_attention.4} parent=5 // pred_check
      %p1082 = pneg %p1081
    $region46: #{causal_self_attention.4} parent=5 // pred_check_branch
      %1084 = sbr.rel (%p1082) target = $region48
    $region47: #{causal_self_attention.4} parent=5 // pred_region
      %s1085 = ssub.s32 %s8, 2
      // Predicated region
      $region49: #{causal_self_attention.4} parent=47 // pred_check
        %p1086 = pneg %p114
      $region50: #{causal_self_attention.4} parent=47 // pred_check_branch
        %1088 = sbr.rel (%p1086) target = $region52
      $region51: #{causal_self_attention.4} parent=47 // pred_region
        %p1089 = scmp.lt.s32.totalorder %s21, 1
        %s1090 = scalar_select %p1089, %s21, 1
        %p1091 = scmp.lt.s32.totalorder %s22, 0
        %s1092 = scalar_select %p1091, %s22, 0
        %s1093 = sadd.s32 %s1092, %s1090
        %s1094 = smul.addr %s1093, 8
        %s1095 = scalar_lea.vmem %s2, %s1094
      $region52: #{causal_self_attention.4} parent=47 // pred_fallthru
        _
    $region48: #{causal_self_attention.4} parent=5 // pred_fallthru
      _
  $region6: #{causal_self_attention.4} parent=0 // loop_footer
    %s12 = sadd.s32 1, %s8
  $region7: #{causal_self_attention.4} parent=0 // loop_footer_branch
    %7 = sbr.rel target = $region3
  $region8: #{causal_self_attention.4} parent=0 // loop_exit
    _

</llo_original>
